<compile_context>
chip_gen: v6e
topology: v6e:2x2x1
jax: 0.10.0
libtpu: 0.0.40
codegen_flags: <defaults>
</compile_context>

<pallas_src>
import math
import jax
import jax.numpy as jnp
from jax import lax
from jax.experimental import pallas as pl
from jax.experimental.pallas import tpu as pltpu

NEG_SLOPE = 0.2  # LeakyReLU negative_slope used by the PyTorch module


def _round_up(x, m):
    return ((x + m - 1) // m) * m


# ---------------------------------------------------------------------------
# Kernel 1: fused per-edge projections + padded-edge masking.
#   h        = LeakyReLU(x @ W_attn + b_attn)              (f32 accumulate)
#   attn_raw = h @ wv        wv[j, h] = attn_vec[j] * (j // Dh == h)
#              padded rows are masked to -1e30 in-kernel.
#   h_aggr   = x @ W_aggr_full + b_aggr   (W_aggr_full has zero rows for the
#              tail-embedding columns, so this equals concat_aggr @ W_aggr)
# x / W_attn / W_aggr_full / wv are streamed in compute_dtype (bf16 default).
# ---------------------------------------------------------------------------
def _make_edge_proj_kernel(num_real_edges):
    def kernel(x_ref, wa_ref, ba_ref, wg_ref, bg_ref, wv_ref,
               attn_ref, aggr_ref):
        x = x_ref[...]                                              # (te, Ka)

        h = jnp.dot(x, wa_ref[...], preferred_element_type=jnp.float32)
        h = h + ba_ref[...]
        h = jnp.where(h >= 0.0, h, NEG_SLOPE * h)                   # LeakyReLU
        attn = jnp.dot(h.astype(wv_ref.dtype), wv_ref[...],
                       preferred_element_type=jnp.float32)          # (te, H)

        # mask padded rows so they never perturb the per-entity softmax
        te = attn_ref.shape[0]
        row = (pl.program_id(0) * te
               + lax.broadcasted_iota(jnp.int32, attn.shape, 0))
        attn_ref[...] = jnp.where(row < num_real_edges, attn, -1e30)

        g = jnp.dot(x, wg_ref[...], preferred_element_type=jnp.float32)
        g = g + bg_ref[...]
        aggr_ref[...] = g.astype(aggr_ref.dtype)                    # (te, dout)
    return kernel


def edge_projections_pallas(x, w_attn, b_attn, w_aggr_full, b_aggr, wv, *,
                            te, num_real_edges):
    E_pad, Ka = x.shape
    dout = w_attn.shape[1]
    H = wv.shape[1]
    return pl.pallas_call(
        _make_edge_proj_kernel(num_real_edges),
        out_shape=(jax.ShapeDtypeStruct((E_pad, H), jnp.float32),
                   jax.ShapeDtypeStruct((E_pad, dout), x.dtype)),
        grid_spec=pltpu.PrefetchScalarGridSpec(
            num_scalar_prefetch=0,
            grid=(E_pad // te,),
            in_specs=[
                pl.BlockSpec((te, Ka), lambda e: (e, 0)),
                pl.BlockSpec((Ka, dout), lambda e: (0, 0)),
                pl.BlockSpec((1, dout), lambda e: (0, 0)),
                pl.BlockSpec((Ka, dout), lambda e: (0, 0)),
                pl.BlockSpec((1, dout), lambda e: (0, 0)),
                pl.BlockSpec((dout, H), lambda e: (0, 0)),
            ],
            out_specs=[
                pl.BlockSpec((te, H), lambda e: (e, 0)),
                pl.BlockSpec((te, dout), lambda e: (e, 0)),
            ]),
        compiler_params=pltpu.CompilerParams(
            dimension_semantics=("parallel",)),
    )(x, w_attn, b_attn, w_aggr_full, b_aggr, wv)


# ---------------------------------------------------------------------------
# Full forward pass (glue in plain JAX, hot per-edge path in Pallas)
# ---------------------------------------------------------------------------
def ingram_entity_layer_forward(emb_ent, emb_rel, triplets, params, *,
                                num_head, compute_dtype=jnp.bfloat16,
                                te_max=4096):
    num_ent, din = emb_ent.shape
    dout = params["w_attn"].shape[1]
    dim_hid = dout // num_head

    head_idxs = triplets[:, 0]
    rel_idxs = triplets[:, 1]
    tail_idxs = triplets[:, 2]

    # self-relation embedding per entity (mean of incoming relation embeddings)
    ones = jnp.ones(tail_idxs.shape, jnp.float32)
    ent_freq = jax.ops.segment_sum(ones, tail_idxs, num_segments=num_ent)[:, None]
    self_rel = jax.ops.segment_sum(emb_rel[rel_idxs], tail_idxs,
                                   num_segments=num_ent) / (ent_freq + 1e-16)

    # append self-loop edges
    emb_rels = jnp.concatenate([emb_rel[rel_idxs], self_rel], axis=0)
    ar = jnp.arange(num_ent, dtype=triplets.dtype)
    head_all = jnp.concatenate([head_idxs, ar], axis=0)
    tail_all = jnp.concatenate([tail_idxs, ar], axis=0)

    # edge tile size: as large as te_max, but keep >= 2 grid steps when E > 128
    # so v7x's two TensorCores both get work; pad edge axis to a multiple.
    E = int(head_all.shape[0])
    te = min(te_max, _round_up(-(-E // 2), 128))
    E_pad = _round_up(E, te)
    pad = E_pad - E

    # build the per-edge feature matrix directly in compute_dtype
    emb_ent_c = emb_ent.astype(compute_dtype)
    emb_rels_c = emb_rels.astype(compute_dtype)
    concat_att = jnp.concatenate(
        [emb_ent_c[tail_all], emb_ent_c[head_all], emb_rels_c], axis=-1)  # (E, Ka)
    x = jnp.pad(concat_att, ((0, pad), (0, 0)))
    tail_pad = jnp.concatenate(
        [tail_all, jnp.zeros((pad,), tail_all.dtype)], axis=0)

    # structural matrices (tiny, resident in VMEM inside the kernel)
    head_pool = (jnp.arange(dout)[:, None] // dim_hid ==
                 jnp.arange(num_head)[None, :]).astype(jnp.float32)      # (dout, H)
    wv = (params["attn_vec"].reshape(dout)[:, None] * head_pool
          ).astype(compute_dtype)                                        # (dout, H)
    # zero rows for the tail-embedding columns so the kernel can reuse x directly
    w_aggr_full = jnp.concatenate(
        [jnp.zeros((din, dout), params["w_aggr"].dtype), params["w_aggr"]],
        axis=0)                                                          # (Ka, dout)

    attn_raw, h_aggr = edge_projections_pallas(
        x,
        params["w_attn"].astype(compute_dtype), params["b_attn"],
        w_aggr_full.astype(compute_dtype), params["b_aggr"],
        wv, te=te, num_real_edges=E)
    # padded rows of attn_raw are already -1e30 (masked in-kernel)

    # softmax over incoming edges of each tail entity
    # TODO(synk): the irregular per-entity softmax (segment max/sum) and the
    # final index_add scatter stay as jax segment ops -- no clean Pallas
    # equivalent for data-dependent scatter at these shapes.
    attn_max = jax.ops.segment_max(attn_raw, tail_pad, num_segments=num_ent)
    attn_val = jnp.exp(attn_raw - attn_max[tail_pad])
    attn_sums = jax.ops.segment_sum(attn_val, tail_pad, num_segments=num_ent)
    beta = attn_val / (attn_sums[tail_pad] + 1e-16)                      # (E_pad, H)

    # per-edge weighted values: plain jnp so XLA fuses it into the scatter
    # operand (no HBM round-trip for `av`); padded rows have beta == 0.
    beta_exp = jnp.broadcast_to(
        beta[:, :, None], (E_pad, num_head, dim_hid)).reshape(E_pad, dout)
    av = beta_exp * h_aggr.astype(jnp.float32)                           # (E_pad, dout)

    # scatter-add per-edge values onto their tail entities
    out = jax.ops.segment_sum(av, tail_pad, num_segments=num_ent)
    return out                                                           # (num_ent, dout)


# ---------------------------------------------------------------------------
# Pure-JAX reference (mirrors the PyTorch code) for correctness checks
# ---------------------------------------------------------------------------
def reference_forward(emb_ent, emb_rel, triplets, params, *, num_head):
    num_ent = emb_ent.shape[0]
    dout = params["w_attn"].shape[1]
    dim_hid = dout // num_head
    hi, ri, ti = triplets[:, 0], triplets[:, 1], triplets[:, 2]

    ones = jnp.ones(ti.shape, jnp.float32)
    ent_freq = jax.ops.segment_sum(ones, ti, num_segments=num_ent)[:, None]
    self_rel = jax.ops.segment_sum(emb_rel[ri], ti, num_segments=num_ent) / (ent_freq + 1e-16)
    emb_rels = jnp.concatenate([emb_rel[ri], self_rel], axis=0)
    ar = jnp.arange(num_ent, dtype=triplets.dtype)
    ha = jnp.concatenate([hi, ar]); ta = jnp.concatenate([ti, ar])

    cat_att = jnp.concatenate([emb_ent[ta], emb_ent[ha], emb_rels], axis=-1)
    h = jnp.dot(cat_att, params["w_attn"], precision=lax.Precision.HIGHEST) + params["b_attn"]
    h = jnp.where(h >= 0.0, h, NEG_SLOPE * h).reshape(-1, num_head, dim_hid)
    attn_raw = (h * params["attn_vec"]).sum(-1)                      # (E, H)

    attn_max = jax.ops.segment_max(attn_raw, ta, num_segments=num_ent)
    attn_val = jnp.exp(attn_raw - attn_max[ta])
    attn_sums = jax.ops.segment_sum(attn_val, ta, num_segments=num_ent)
    beta = attn_val / (attn_sums[ta] + 1e-16)

    cat_ag = jnp.concatenate([emb_ent[ha], emb_rels], axis=-1)
    ag = jnp.dot(cat_ag, params["w_aggr"], precision=lax.Precision.HIGHEST) + params["b_aggr"]
    ag = ag.reshape(-1, num_head, dim_hid)
    val = beta[..., None] * ag
    out = jax.ops.segment_sum(val.reshape(-1, dout), ta, num_segments=num_ent)
    return out


# ---------------------------------------------------------------------------
if __name__ == "__main__":
    # small shapes consistent with the module; E = 250 + 16 = 266 (not a
    # multiple of 128 -> exercises the padding/masking path and a 2-step grid)
    NUM_ENT, NUM_REL, NUM_TRI = 16, 8, 250
    DIM_IN, DIM_OUT, DIM_REL, NUM_HEAD = 32, 32, 32, 8
    DIM_HID = DIM_OUT // NUM_HEAD
    KA = 2 * DIM_IN + DIM_REL                        # attn_proj in-features
    KG = DIM_IN + DIM_REL                            # aggr_proj in-features

    key = jax.random.PRNGKey(0)
    k_ent, k_rel, k_h, k_r, k_t, k_wa, k_vec, k_wg = jax.random.split(key, 8)

    emb_ent = jax.random.normal(k_ent, (NUM_ENT, DIM_IN), jnp.float32)
    emb_rel = jax.random.normal(k_rel, (NUM_REL, DIM_REL), jnp.float32)
    triplets = jnp.stack([
        jax.random.randint(k_h, (NUM_TRI,), 0, NUM_ENT),
        jax.random.randint(k_r, (NUM_TRI,), 0, NUM_REL),
        jax.random.randint(k_t, (NUM_TRI,), 0, NUM_ENT),
    ], axis=-1).astype(jnp.int32)

    # deterministic xavier_normal-style init (gain = sqrt(2) for 'relu')
    gain = math.sqrt(2.0)
    std_attn = gain * math.sqrt(2.0 / (KA + DIM_OUT))
    std_aggr = gain * math.sqrt(2.0 / (KG + DIM_OUT))
    std_vec = gain * math.sqrt(2.0 / (NUM_HEAD * DIM_HID + DIM_HID))

    params = {
        "w_attn": std_attn * jax.random.normal(k_wa, (KA, DIM_OUT), jnp.float32),
        "b_attn": jnp.zeros((1, DIM_OUT), jnp.float32),
        "attn_vec": std_vec * jax.random.normal(k_vec, (1, NUM_HEAD, DIM_HID), jnp.float32),
        "w_aggr": std_aggr * jax.random.normal(k_wg, (KG, DIM_OUT), jnp.float32),
        "b_aggr": jnp.zeros((1, DIM_OUT), jnp.float32),
    }

    ref = jax.block_until_ready(
        reference_forward(emb_ent, emb_rel, triplets, params, num_head=NUM_HEAD))

    # f32 compute path: tight structural check against the HIGHEST-precision ref
    out_f32 = jax.block_until_ready(
        ingram_entity_layer_forward(emb_ent, emb_rel, triplets, params,
                                    num_head=NUM_HEAD,
                                    compute_dtype=jnp.float32))
    # bf16 compute path (default / performance path): looser numeric check
    out_bf16 = jax.block_until_ready(
        ingram_entity_layer_forward(emb_ent, emb_rel, triplets, params,
                                    num_head=NUM_HEAD,
                                    compute_dtype=jnp.bfloat16))

    assert out_f32.shape == (NUM_ENT, DIM_OUT)
    assert out_bf16.shape == (NUM_ENT, DIM_OUT)
    err_f32 = float(jnp.max(jnp.abs(out_f32 - ref)))
    err_bf16 = float(jnp.max(jnp.abs(out_bf16 - ref)))
    assert err_f32 < 3e-3, f"f32 path max abs err {err_f32}"
    assert err_bf16 < 2e-1, f"bf16 path max abs err {err_bf16}"

    print("KERNEL_OK")
</pallas_src>

<mosaic_0001>
module attributes {stable_mosaic.version = 11 : i64} {
  func.func @kernel(%arg0: i32, %arg1: memref<256x96xf32, #tpu.memory_space<vmem>>, %arg2: memref<96x32xf32, #tpu.memory_space<vmem>>, %arg3: memref<1x32xf32, #tpu.memory_space<vmem>>, %arg4: memref<96x32xf32, #tpu.memory_space<vmem>>, %arg5: memref<1x32xf32, #tpu.memory_space<vmem>>, %arg6: memref<32x8xf32, #tpu.memory_space<vmem>>, %arg7: memref<256x8xf32, #tpu.memory_space<vmem>>, %arg8: memref<256x32xf32, #tpu.memory_space<vmem>>) attributes {dimension_semantics = [#tpu.dimension_semantics<parallel>], iteration_bounds = array<i64: 2>, scalar_prefetch = 0 : i64, scratch_operands = 0 : i64, tpu.core_type = #tpu.core_type<tc>, window_params = [{transform_indices = @transform_0, window_bounds = array<i64: 256, 96>}, {pipeline_mode = #tpu.pipeline_mode<synchronous>, transform_indices = @transform_1, window_bounds = array<i64: 96, 32>}, {pipeline_mode = #tpu.pipeline_mode<synchronous>, transform_indices = @transform_2, window_bounds = array<i64: 1, 32>}, {pipeline_mode = #tpu.pipeline_mode<synchronous>, transform_indices = @transform_3, window_bounds = array<i64: 96, 32>}, {pipeline_mode = #tpu.pipeline_mode<synchronous>, transform_indices = @transform_4, window_bounds = array<i64: 1, 32>}, {pipeline_mode = #tpu.pipeline_mode<synchronous>, transform_indices = @transform_5, window_bounds = array<i64: 32, 8>}, {transform_indices = @transform_6, window_bounds = array<i64: 256, 8>}, {transform_indices = @transform_7, window_bounds = array<i64: 256, 32>}]} {
    %c0 = arith.constant 0 : index
    %c0_0 = arith.constant 0 : index
    %0 = vector.load %arg1[%c0, %c0_0] : memref<256x96xf32, #tpu.memory_space<vmem>>, vector<256x96xf32>
    %c0_1 = arith.constant 0 : index
    %c0_2 = arith.constant 0 : index
    %1 = vector.load %arg2[%c0_1, %c0_2] : memref<96x32xf32, #tpu.memory_space<vmem>>, vector<96x32xf32>
    %cst = arith.constant dense<0.000000e+00> : vector<256x32xf32>
    %2 = tpu.matmul %0, %1, %cst {dimension_numbers = #tpu.dot_dimension_numbers<[1], [0], [0], [1], [0, 0, 1, 1], [], []>} : vector<256x96xf32>, vector<96x32xf32>, vector<256x32xf32> -> vector<256x32xf32>
    %c0_3 = arith.constant 0 : index
    %c0_4 = arith.constant 0 : index
    %3 = vector.load %arg3[%c0_3, %c0_4] : memref<1x32xf32, #tpu.memory_space<vmem>>, vector<1x32xf32>
    %4 = vector.broadcast %3 : vector<1x32xf32> to vector<256x32xf32>
    %5 = arith.addf %2, %4 : vector<256x32xf32>
    %cst_5 = arith.constant 0.000000e+00 : f32
    %6 = vector.broadcast %cst_5 : f32 to vector<256x32xf32>
    %7 = arith.cmpf oge, %5, %6 : vector<256x32xf32>
    %cst_6 = arith.constant 2.000000e-01 : f32
    %8 = vector.broadcast %cst_6 : f32 to vector<256x32xf32>
    %9 = arith.mulf %8, %5 : vector<256x32xf32>
    %10 = arith.select %7, %5, %9 : vector<256x32xi1>, vector<256x32xf32>
    %c0_7 = arith.constant 0 : index
    %c0_8 = arith.constant 0 : index
    %11 = vector.load %arg6[%c0_7, %c0_8] : memref<32x8xf32, #tpu.memory_space<vmem>>, vector<32x8xf32>
    %cst_9 = arith.constant dense<0.000000e+00> : vector<256x8xf32>
    %12 = tpu.matmul %10, %11, %cst_9 {dimension_numbers = #tpu.dot_dimension_numbers<[1], [0], [0], [1], [0, 0, 1, 1], [], []>} : vector<256x32xf32>, vector<32x8xf32>, vector<256x8xf32> -> vector<256x8xf32>
    %c256_i32 = arith.constant 256 : i32
    %13 = arith.muli %arg0, %c256_i32 : i32
    %14 = tpu.iota {dimensions = array<i32: 0>} : vector<256x8xi32>
    %15 = vector.broadcast %13 : i32 to vector<256x8xi32>
    %16 = arith.addi %15, %14 : vector<256x8xi32>
    %c266_i32 = arith.constant 266 : i32
    %17 = vector.broadcast %c266_i32 : i32 to vector<256x8xi32>
    %18 = arith.cmpi slt, %16, %17 : vector<256x8xi32>
    %cst_10 = arith.constant -1.000000e+30 : f32
    %19 = vector.broadcast %cst_10 : f32 to vector<256x8xf32>
    %20 = arith.select %18, %12, %19 : vector<256x8xi1>, vector<256x8xf32>
    %c0_11 = arith.constant 0 : index
    %c0_12 = arith.constant 0 : index
    %21 = vector.load %arg7[%c0_11, %c0_12] : memref<256x8xf32, #tpu.memory_space<vmem>>, vector<256x8xf32>
    tpu.vector_store %arg7[%c0_11, %c0_12], %20 {strides = array<i32>} : memref<256x8xf32, #tpu.memory_space<vmem>>, vector<256x8xf32>,
    %c0_13 = arith.constant 0 : index
    %c0_14 = arith.constant 0 : index
    %22 = vector.load %arg4[%c0_13, %c0_14] : memref<96x32xf32, #tpu.memory_space<vmem>>, vector<96x32xf32>
    %cst_15 = arith.constant dense<0.000000e+00> : vector<256x32xf32>
    %23 = tpu.matmul %0, %22, %cst_15 {dimension_numbers = #tpu.dot_dimension_numbers<[1], [0], [0], [1], [0, 0, 1, 1], [], []>} : vector<256x96xf32>, vector<96x32xf32>, vector<256x32xf32> -> vector<256x32xf32>
    %c0_16 = arith.constant 0 : index
    %c0_17 = arith.constant 0 : index
    %24 = vector.load %arg5[%c0_16, %c0_17] : memref<1x32xf32, #tpu.memory_space<vmem>>, vector<1x32xf32>
    %25 = vector.broadcast %24 : vector<1x32xf32> to vector<256x32xf32>
    %26 = arith.addf %23, %25 : vector<256x32xf32>
    %c0_18 = arith.constant 0 : index
    %c0_19 = arith.constant 0 : index
    %27 = vector.load %arg8[%c0_18, %c0_19] : memref<256x32xf32, #tpu.memory_space<vmem>>, vector<256x32xf32>
    tpu.vector_store %arg8[%c0_18, %c0_19], %26 {strides = array<i32>} : memref<256x32xf32, #tpu.memory_space<vmem>>, vector<256x32xf32>,
    return
  }
  func.func @transform_0(%arg0: i32) -> (i32, i32) {
    %c0_i32 = arith.constant 0 : i32
    %c0_i32_0 = arith.constant 0 : i32
    return %arg0, %c0_i32 : i32, i32
  }
  func.func @transform_1(%arg0: i32) -> (i32, i32) {
    %c0_i32 = arith.constant 0 : i32
    %c0_i32_0 = arith.constant 0 : i32
    %c0_i32_1 = arith.constant 0 : i32
    return %c0_i32, %c0_i32_0 : i32, i32
  }
  func.func @transform_2(%arg0: i32) -> (i32, i32) {
    %c0_i32 = arith.constant 0 : i32
    %c0_i32_0 = arith.constant 0 : i32
    %c0_i32_1 = arith.constant 0 : i32
    return %c0_i32, %c0_i32_0 : i32, i32
  }
  func.func @transform_3(%arg0: i32) -> (i32, i32) {
    %c0_i32 = arith.constant 0 : i32
    %c0_i32_0 = arith.constant 0 : i32
    %c0_i32_1 = arith.constant 0 : i32
    return %c0_i32, %c0_i32_0 : i32, i32
  }
  func.func @transform_4(%arg0: i32) -> (i32, i32) {
    %c0_i32 = arith.constant 0 : i32
    %c0_i32_0 = arith.constant 0 : i32
    %c0_i32_1 = arith.constant 0 : i32
    return %c0_i32, %c0_i32_0 : i32, i32
  }
  func.func @transform_5(%arg0: i32) -> (i32, i32) {
    %c0_i32 = arith.constant 0 : i32
    %c0_i32_0 = arith.constant 0 : i32
    %c0_i32_1 = arith.constant 0 : i32
    return %c0_i32, %c0_i32_0 : i32, i32
  }
  func.func @transform_6(%arg0: i32) -> (i32, i32) {
    %c0_i32 = arith.constant 0 : i32
    %c0_i32_0 = arith.constant 0 : i32
    return %arg0, %c0_i32 : i32, i32
  }
  func.func @transform_7(%arg0: i32) -> (i32, i32) {
    %c0_i32 = arith.constant 0 : i32
    %c0_i32_0 = arith.constant 0 : i32
    return %arg0, %c0_i32 : i32, i32
  }
}

</mosaic_0001>

<llo_original>
// kernel: tpu_custom_call.1
$region0: #{tpu_custom_call.1}
  #allocation0 [shape = 'u32[]', space=smem, size = 0x4, offset = 0x4, fixed_abs, tag = 'smem constant byte address 0x4 - core index']
  #allocation1 [shape = 'u32[144,128]{1,0:T(1,128)}', space=vmem, size = 0x12000, scoped, tag = 'internal scratch']
  %s0 = inlined_call_operand.vmem [shape: f32[512,96], index: 0, kind: input, shape index: {}]
  %s1 = inlined_call_operand.vmem [shape: f32[96,32], index: 1, kind: input, shape index: {}]
  %s2 = inlined_call_operand.vmem [shape: f32[1,32], index: 2, kind: input, shape index: {}]
  %s3 = inlined_call_operand.vmem [shape: f32[96,32], index: 3, kind: input, shape index: {}]
  %s4 = inlined_call_operand.vmem [shape: f32[1,32], index: 4, kind: input, shape index: {}]
  %s5 = inlined_call_operand.vmem [shape: f32[32,8], index: 5, kind: input, shape index: {}]
  %s6 = inlined_call_operand.vmem [shape: f32[512,8], index: 6, kind: output, shape index: {0}]
  %s7 = inlined_call_operand.vmem [shape: f32[512,32], index: 7, kind: output, shape index: {1}]
  %8 = xla_tuple %s6, %s7
  %s9 = sld [smem:[#allocation0]]
  $region65: #{tpu_custom_call.1} parent=0
    _
  %s11 = ssub.s32 1, %s9
  %s12 = scalar_select 0, %s11, %s9
  loop: start=0, step=1, limit=4
  $region2: #{tpu_custom_call.1} parent=0 // loop_pre_header
    _
  $region3: #{tpu_custom_call.1} parent=0 // loop_header
    %s14 = sphi 0, %s18
    %p15 = scmp.ge.s32.totalorder %s14, 4
    %s24 = sphi 0, %s26
    %s27 = sphi 0, %s24
    %s28 = sphi 0, %s27
    %s44 = sphi 0, %s28
    %s48 = sphi 0, %s48
    %s50 = sphi 0, %s48
    %s51 = sphi 0, %s50
    %s65 = sphi 0, %s51
    %s69 = sphi 0, %s69
    %s71 = sphi 0, %s69
    %s72 = sphi 0, %s71
    %s86 = sphi 0, %s72
    %s90 = sphi 0, %s90
    %s92 = sphi 0, %s90
    %s93 = sphi 0, %s92
    %s107 = sphi 0, %s93
    %s111 = sphi 0, %s111
    %s113 = sphi 0, %s111
    %s114 = sphi 0, %s113
    %s128 = sphi 0, %s114
    %s132 = sphi 0, %s132
    %s134 = sphi 0, %s132
    %s135 = sphi 0, %s134
    %s149 = sphi 0, %s135
    %s155 = sphi 0, %s157
    %s158 = sphi 0, %s155
    %s159 = sphi 0, %s158
    %s175 = sphi 0, %s159
    %s181 = sphi 0, %s183
    %s184 = sphi 0, %s181
    %s185 = sphi 0, %s184
    %s201 = sphi 0, %s185
  $region4: #{tpu_custom_call.1} parent=0 // loop_header_branch
    %17 = sbr.rel (%p15) target = $region8
  $region5: #{tpu_custom_call.1} parent=0 // loop_body
    %s19 = ssub.s32 %s14, 1
    %s20 = ssub.s32 %s14, 2
    %s21 = sadd.s32 %s14, 1
    %s22 = ssub.s32 %s14, %s21
    %p23 = scmp.eq.s32.totalorder %s22, 0
    %s25 = sadd.s32 %s24, 1
    %s26 = scalar_select %p23, %s24, %s25
    %p29 = pneg %p23
    %p30 = scmp.eq.s32.totalorder %s14, 1
    %p31 = por %p29, %p30
    %p32 = scmp.ne.s32.totalorder %s24, %s27
    %p33 = scmp.eq.s32.totalorder %s14, 0
    %p34 = por %p32, %p33
    %p35 = scmp.ne.s32.totalorder %s24, %s27
    %p36 = scmp.eq.s32.totalorder %s19, 1
    %p37 = por %p35, %p36
    %p38 = scmp.ne.s32.totalorder %s27, %s28
    %p39 = scmp.eq.s32.totalorder %s19, 0
    %p40 = por %p38, %p39
    %p41 = scmp.ne.s32.totalorder %s27, %s28
    %p42 = scmp.eq.s32.totalorder %s20, 1
    %p43 = por %p41, %p42
    %p45 = scmp.ne.s32.totalorder %s28, %s44
    %p46 = scmp.eq.s32.totalorder %s20, 0
    %p47 = por %p45, %p46
    %s49 = sadd.s32 %s48, 1
    %p52 = scmp.eq.s32.totalorder %s14, 1
    %p53 = scmp.ne.s32.totalorder %s48, %s50
    %p54 = scmp.eq.s32.totalorder %s14, 0
    %p55 = por %p53, %p54
    %p56 = scmp.ne.s32.totalorder %s48, %s50
    %p57 = scmp.eq.s32.totalorder %s19, 1
    %p58 = por %p56, %p57
    %p59 = scmp.ne.s32.totalorder %s50, %s51
    %p60 = scmp.eq.s32.totalorder %s19, 0
    %p61 = por %p59, %p60
    %p62 = scmp.ne.s32.totalorder %s50, %s51
    %p63 = scmp.eq.s32.totalorder %s20, 1
    %p64 = por %p62, %p63
    %p66 = scmp.ne.s32.totalorder %s51, %s65
    %p67 = scmp.eq.s32.totalorder %s20, 0
    %p68 = por %p66, %p67
    %s70 = sadd.s32 %s69, 1
    %p73 = scmp.eq.s32.totalorder %s14, 1
    %p74 = scmp.ne.s32.totalorder %s69, %s71
    %p75 = scmp.eq.s32.totalorder %s14, 0
    %p76 = por %p74, %p75
    %p77 = scmp.ne.s32.totalorder %s69, %s71
    %p78 = scmp.eq.s32.totalorder %s19, 1
    %p79 = por %p77, %p78
    %p80 = scmp.ne.s32.totalorder %s71, %s72
    %p81 = scmp.eq.s32.totalorder %s19, 0
    %p82 = por %p80, %p81
    %p83 = scmp.ne.s32.totalorder %s71, %s72
    %p84 = scmp.eq.s32.totalorder %s20, 1
    %p85 = por %p83, %p84
    %p87 = scmp.ne.s32.totalorder %s72, %s86
    %p88 = scmp.eq.s32.totalorder %s20, 0
    %p89 = por %p87, %p88
    %s91 = sadd.s32 %s90, 1
    %p94 = scmp.eq.s32.totalorder %s14, 1
    %p95 = scmp.ne.s32.totalorder %s90, %s92
    %p96 = scmp.eq.s32.totalorder %s14, 0
    %p97 = por %p95, %p96
    %p98 = scmp.ne.s32.totalorder %s90, %s92
    %p99 = scmp.eq.s32.totalorder %s19, 1
    %p100 = por %p98, %p99
    %p101 = scmp.ne.s32.totalorder %s92, %s93
    %p102 = scmp.eq.s32.totalorder %s19, 0
    %p103 = por %p101, %p102
    %p104 = scmp.ne.s32.totalorder %s92, %s93
    %p105 = scmp.eq.s32.totalorder %s20, 1
    %p106 = por %p104, %p105
    %p108 = scmp.ne.s32.totalorder %s93, %s107
    %p109 = scmp.eq.s32.totalorder %s20, 0
    %p110 = por %p108, %p109
    %s112 = sadd.s32 %s111, 1
    %p115 = scmp.eq.s32.totalorder %s14, 1
    %p116 = scmp.ne.s32.totalorder %s111, %s113
    %p117 = scmp.eq.s32.totalorder %s14, 0
    %p118 = por %p116, %p117
    %p119 = scmp.ne.s32.totalorder %s111, %s113
    %p120 = scmp.eq.s32.totalorder %s19, 1
    %p121 = por %p119, %p120
    %p122 = scmp.ne.s32.totalorder %s113, %s114
    %p123 = scmp.eq.s32.totalorder %s19, 0
    %p124 = por %p122, %p123
    %p125 = scmp.ne.s32.totalorder %s113, %s114
    %p126 = scmp.eq.s32.totalorder %s20, 1
    %p127 = por %p125, %p126
    %p129 = scmp.ne.s32.totalorder %s114, %s128
    %p130 = scmp.eq.s32.totalorder %s20, 0
    %p131 = por %p129, %p130
    %s133 = sadd.s32 %s132, 1
    %p136 = scmp.eq.s32.totalorder %s14, 1
    %p137 = scmp.ne.s32.totalorder %s132, %s134
    %p138 = scmp.eq.s32.totalorder %s14, 0
    %p139 = por %p137, %p138
    %p140 = scmp.ne.s32.totalorder %s132, %s134
    %p141 = scmp.eq.s32.totalorder %s19, 1
    %p142 = por %p140, %p141
    %p143 = scmp.ne.s32.totalorder %s134, %s135
    %p144 = scmp.eq.s32.totalorder %s19, 0
    %p145 = por %p143, %p144
    %p146 = scmp.ne.s32.totalorder %s134, %s135
    %p147 = scmp.eq.s32.totalorder %s20, 1
    %p148 = por %p146, %p147
    %p150 = scmp.ne.s32.totalorder %s135, %s149
    %p151 = scmp.eq.s32.totalorder %s20, 0
    %p152 = por %p150, %p151
    %s153 = ssub.s32 %s14, %s21
    %p154 = scmp.eq.s32.totalorder %s153, 0
    %s156 = sadd.s32 %s155, 1
    %s157 = scalar_select %p154, %s155, %s156
    %p160 = pneg %p154
    %p161 = scmp.eq.s32.totalorder %s14, 1
    %p162 = por %p160, %p161
    %p163 = scmp.ne.s32.totalorder %s155, %s158
    %p164 = scmp.eq.s32.totalorder %s14, 0
    %p165 = por %p163, %p164
    %p166 = scmp.ne.s32.totalorder %s155, %s158
    %p167 = scmp.eq.s32.totalorder %s19, 1
    %p168 = por %p166, %p167
    %p169 = scmp.ne.s32.totalorder %s158, %s159
    %p170 = scmp.eq.s32.totalorder %s19, 0
    %p171 = por %p169, %p170
    %p172 = scmp.ne.s32.totalorder %s158, %s159
    %p173 = scmp.eq.s32.totalorder %s20, 1
    %p174 = por %p172, %p173
    %p176 = scmp.ne.s32.totalorder %s159, %s175
    %p177 = scmp.eq.s32.totalorder %s20, 0
    %p178 = por %p176, %p177
    %s179 = ssub.s32 %s14, %s21
    %p180 = scmp.eq.s32.totalorder %s179, 0
    %s182 = sadd.s32 %s181, 1
    %s183 = scalar_select %p180, %s181, %s182
    %p186 = pneg %p180
    %p187 = scmp.eq.s32.totalorder %s14, 1
    %p188 = por %p186, %p187
    %p189 = scmp.ne.s32.totalorder %s181, %s184
    %p190 = scmp.eq.s32.totalorder %s14, 0
    %p191 = por %p189, %p190
    %p192 = scmp.ne.s32.totalorder %s181, %s184
    %p193 = scmp.eq.s32.totalorder %s19, 1
    %p194 = por %p192, %p193
    %p195 = scmp.ne.s32.totalorder %s184, %s185
    %p196 = scmp.eq.s32.totalorder %s19, 0
    %p197 = por %p195, %p196
    %p198 = scmp.ne.s32.totalorder %s184, %s185
    %p199 = scmp.eq.s32.totalorder %s20, 1
    %p200 = por %p198, %p199
    %p202 = scmp.ne.s32.totalorder %s185, %s201
    %p203 = scmp.eq.s32.totalorder %s20, 0
    %p204 = por %p202, %p203
    %p205 = scmp.le.s32.totalorder 1, %s14
    %p206 = scmp.lt.s32.totalorder %s14, 3
    %p207 = pnand %p205, %p206
    %p208 = pneg %p207
    // Predicated region
    $region9: #{tpu_custom_call.1} parent=5 // pred_check
      _
    $region10: #{tpu_custom_call.1} parent=5 // pred_check_branch
      %210 = sbr.rel (%p207) target = $region12
    $region11: #{tpu_custom_call.1} parent=5 // pred_region
      %s211 = ssub.s32 %s14, 1
      // Predicated region
      $region13: #{tpu_custom_call.1} parent=11 // pred_check
        %p212 = pneg %p61
      $region14: #{tpu_custom_call.1} parent=11 // pred_check_branch
        %214 = sbr.rel (%p212) target = $region16
      $region15: #{tpu_custom_call.1} parent=11 // pred_region
        _
      $region16: #{tpu_custom_call.1} parent=11 // pred_fallthru
        _
      // Predicated region
      $region17: #{tpu_custom_call.1} parent=11 // pred_check
        %p215 = pneg %p82
      $region18: #{tpu_custom_call.1} parent=11 // pred_check_branch
        %217 = sbr.rel (%p215) target = $region20
      $region19: #{tpu_custom_call.1} parent=11 // pred_region
        _
      $region20: #{tpu_custom_call.1} parent=11 // pred_fallthru
        _
      // Predicated region
      $region21: #{tpu_custom_call.1} parent=11 // pred_check
        %p218 = pneg %p103
      $region22: #{tpu_custom_call.1} parent=11 // pred_check_branch
        %220 = sbr.rel (%p218) target = $region24
      $region23: #{tpu_custom_call.1} parent=11 // pred_region
        _
      $region24: #{tpu_custom_call.1} parent=11 // pred_fallthru
        _
      // Predicated region
      $region25: #{tpu_custom_call.1} parent=11 // pred_check
        %p221 = pneg %p124
      $region26: #{tpu_custom_call.1} parent=11 // pred_check_branch
        %223 = sbr.rel (%p221) target = $region28
      $region27: #{tpu_custom_call.1} parent=11 // pred_region
        _
      $region28: #{tpu_custom_call.1} parent=11 // pred_fallthru
        _
      // Predicated region
      $region29: #{tpu_custom_call.1} parent=11 // pred_check
        %p224 = pneg %p145
      $region30: #{tpu_custom_call.1} parent=11 // pred_check_branch
        %226 = sbr.rel (%p224) target = $region32
      $region31: #{tpu_custom_call.1} parent=11 // pred_region
        _
      $region32: #{tpu_custom_call.1} parent=11 // pred_fallthru
        _
    $region12: #{tpu_custom_call.1} parent=5 // pred_fallthru
      _
    %p227 = scmp.lt.s32.totalorder %s14, 2
    // Predicated region
    $region33: #{tpu_custom_call.1} parent=5 // pred_check
      %p228 = pneg %p227
    $region34: #{tpu_custom_call.1} parent=5 // pred_check_branch
      %230 = sbr.rel (%p228) target = $region36
    $region35: #{tpu_custom_call.1} parent=5 // pred_region
      // Predicated region
      $region37: #{tpu_custom_call.1} parent=35 // pred_check
        %p231 = pneg %p34
      $region38: #{tpu_custom_call.1} parent=35 // pred_check_branch
        %233 = sbr.rel (%p231) target = $region40
      $region39: #{tpu_custom_call.1} parent=35 // pred_region
        %s234 = smul.u32 32, %s14
        %p235 = scmp.lt.s32.totalorder %s234, 63
        %s236 = scalar_select %p235, %s234, 63
        %s237 = smul.addr %s236, 8
        %s238 = scalar_lea.vmem %s0, %s237
        %s239 = smul.u32 32, %s14
      $region40: #{tpu_custom_call.1} parent=35 // pred_fallthru
        _
    $region36: #{tpu_custom_call.1} parent=5 // pred_fallthru
      _
    %p240 = scmp.le.s32.totalorder 1, %s14
    %p241 = scmp.lt.s32.totalorder %s14, 3
    %p242 = pnand %p240, %p241
    %p243 = pneg %p242
    // Predicated region
    $region41: #{tpu_custom_call.1} parent=5 // pred_check
      _
    $region42: #{tpu_custom_call.1} parent=5 // pred_check_branch
      %245 = sbr.rel (%p242) target = $region44
    $region43: #{tpu_custom_call.1} parent=5 // pred_region
      %s246 = ssub.s32 %s14, 1
      %s247 = smul.u32 32, %s19
      %p248 = scmp.lt.s32.totalorder %s247, 63
      %s249 = scalar_select %p248, %s247, 63
      %s250 = smul.addr %s249, 8
      %s251 = scalar_lea.vmem %s0, %s250
      %p252 = pneg %p40
      %p253 = pneg %p37
      %p254 = pneg %p61
      %p255 = pneg %p58
      %p256 = pneg %p82
      %p257 = pneg %p79
      %p258 = pneg %p103
      %p259 = pneg %p100
      %p260 = pneg %p124
      %p261 = pneg %p121
      %p262 = pneg %p145
      %p263 = pneg %p142
      %p264 = pneg %p171
      %p265 = pneg %p168
      %s266 = smul.u32 32, %s19
      %p267 = scmp.lt.s32.totalorder %s266, 63
      %s268 = scalar_select %p267, %s266, 63
      %s269 = smul.addr %s268, 8
      %s270 = scalar_lea.vmem %s6, %s269
      %p271 = pneg %p197
      %p272 = pneg %p194
      %s273 = smul.u32 32, %s19
      %p274 = scmp.lt.s32.totalorder %s273, 63
      %s275 = scalar_select %p274, %s273, 63
      %s276 = smul.addr %s275, 8
      %s277 = scalar_lea.vmem %s7, %s276
      %s278 = smul.u32 32, %s19
      %p279 = scmp.lt.s32.totalorder %s278, 63
      %s280 = scalar_select %p279, %s278, 63
      %s281 = smul.addr %s280, 8
      %s282 = scalar_lea.vmem %s0, %s281
      %s283 = smul.u32 32, %s19
      %s284 = smul.u32 32, %s19
      %p285 = scmp.lt.s32.totalorder %s284, 63
      %s286 = scalar_select %p285, %s284, 63
      %s287 = smul.addr %s286, 8
      %s288 = scalar_lea.vmem %s6, %s287
      %s289 = smul.u32 32, %s19
      %s290 = smul.u32 32, %s19
      %p291 = scmp.lt.s32.totalorder %s290, 63
      %s292 = scalar_select %p291, %s290, 63
      %s293 = smul.addr %s292, 8
      %s294 = scalar_lea.vmem %s7, %s293
      %s295 = smul.u32 32, %s19
      %v296 = vld [vmem:[%s282] sm:$0xff]
      %v297 = vld [vmem:[%s282 + $0x8] sm:$0xff]
      %v298 = vld [vmem:[%s282 + $0x10] sm:$0xff]
      %v299 = vld [vmem:[%s282 + $0x18] sm:$0xff]
      %v300 = vld [vmem:[%s282 + $0x20] sm:$0xff]
      %v301 = vld [vmem:[%s282 + $0x28] sm:$0xff]
      %v302 = vld [vmem:[%s282 + $0x30] sm:$0xff]
      %v303 = vld [vmem:[%s282 + $0x38] sm:$0xff]
      %v304 = vld [vmem:[%s282 + $0x40] sm:$0xff]
      %v305 = vld [vmem:[%s282 + $0x48] sm:$0xff]
      %v306 = vld [vmem:[%s282 + $0x50] sm:$0xff]
      %v307 = vld [vmem:[%s282 + $0x58] sm:$0xff]
      %v308 = vld [vmem:[%s282 + $0x60] sm:$0xff]
      %v309 = vld [vmem:[%s282 + $0x68] sm:$0xff]
      %v310 = vld [vmem:[%s282 + $0x70] sm:$0xff]
      %v311 = vld [vmem:[%s282 + $0x78] sm:$0xff]
      %v312 = vld [vmem:[%s282 + $0x80] sm:$0xff]
      %v313 = vld [vmem:[%s282 + $0x88] sm:$0xff]
      %v314 = vld [vmem:[%s282 + $0x90] sm:$0xff]
      %v315 = vld [vmem:[%s282 + $0x98] sm:$0xff]
      %v316 = vld [vmem:[%s282 + $0xa0] sm:$0xff]
      %v317 = vld [vmem:[%s282 + $0xa8] sm:$0xff]
      %v318 = vld [vmem:[%s282 + $0xb0] sm:$0xff]
      %v319 = vld [vmem:[%s282 + $0xb8] sm:$0xff]
      %v320 = vld [vmem:[%s282 + $0xc0] sm:$0xff]
      %v321 = vld [vmem:[%s282 + $0xc8] sm:$0xff]
      %v322 = vld [vmem:[%s282 + $0xd0] sm:$0xff]
      %v323 = vld [vmem:[%s282 + $0xd8] sm:$0xff]
      %v324 = vld [vmem:[%s282 + $0xe0] sm:$0xff]
      %v325 = vld [vmem:[%s282 + $0xe8] sm:$0xff]
      %v326 = vld [vmem:[%s282 + $0xf0] sm:$0xff]
      %v327 = vld [vmem:[%s282 + $0xf8] sm:$0xff]
      %v328 = vld [vmem:[%s1] sm:$0xff]
      %v329 = vld [vmem:[%s1 + $0x8] sm:$0xff]
      %v330 = vld [vmem:[%s1 + $0x10] sm:$0xff]
      %v331 = vld [vmem:[%s1 + $0x18] sm:$0xff]
      %v332 = vld [vmem:[%s1 + $0x20] sm:$0xff]
      %v333 = vld [vmem:[%s1 + $0x28] sm:$0xff]
      %v334 = vld [vmem:[%s1 + $0x30] sm:$0xff]
      %v335 = vld [vmem:[%s1 + $0x38] sm:$0xff]
      %v336 = vld [vmem:[%s1 + $0x40] sm:$0xff]
      %v337 = vld [vmem:[%s1 + $0x48] sm:$0xff]
      %v338 = vld [vmem:[%s1 + $0x50] sm:$0xff]
      %v339 = vld [vmem:[%s1 + $0x58] sm:$0xff]
      %v340 = vld [vmem:[%s2] sm:$0x1]
      %v342 = vlaneseq
      %v343 = vshrl.u32 %v342, 7
      %v344 = vsub.s32 0, %v343
      %v345 = vrot.slane %v340, %v344
      %vm347 = vcmask 785408
      %v349 = vsel %vm347, %v296, 0
      %v352 = vsel %vm347, %v297, 0
      %v355 = vsel %vm347, %v298, 0
      %v358 = vsel %vm347, %v299, 0
      %v361 = vsel %vm347, %v300, 0
      %v364 = vsel %vm347, %v301, 0
      %v367 = vsel %vm347, %v302, 0
      %v370 = vsel %vm347, %v303, 0
      %v373 = vsel %vm347, %v304, 0
      %v376 = vsel %vm347, %v305, 0
      %v379 = vsel %vm347, %v306, 0
      %v382 = vsel %vm347, %v307, 0
      %v385 = vsel %vm347, %v308, 0
      %v388 = vsel %vm347, %v309, 0
      %v391 = vsel %vm347, %v310, 0
      %v394 = vsel %vm347, %v311, 0
      %v397 = vsel %vm347, %v312, 0
      %v400 = vsel %vm347, %v313, 0
      %v403 = vsel %vm347, %v314, 0
      %v406 = vsel %vm347, %v315, 0
      %v409 = vsel %vm347, %v316, 0
      %v412 = vsel %vm347, %v317, 0
      %v415 = vsel %vm347, %v318, 0
      %v418 = vsel %vm347, %v319, 0
      %v421 = vsel %vm347, %v320, 0
      %v424 = vsel %vm347, %v321, 0
      %v427 = vsel %vm347, %v322, 0
      %v430 = vsel %vm347, %v323, 0
      %v433 = vsel %vm347, %v324, 0
      %v436 = vsel %vm347, %v325, 0
      %v439 = vsel %vm347, %v326, 0
      %v442 = vsel %vm347, %v327, 0
      %444 = vmatprep.subr.mxu0 0.0
      %445 = vmatpush1.msra.mxu0 0.0
      %446 = vmatprep.subr.mxu0 0.0
      %447 = vmatpush1.msra.mxu0 0.0
      %448 = vmatprep.subr.mxu0 0.0
      %449 = vmatpush1.msra.mxu0 0.0
      %450 = vmatprep.subr.mxu0 0.0
      %451 = vmatpush1.msra.mxu0 0.0
      %452 = vmatprep.subr.mxu0 0.0
      %453 = vmatpush1.msra.mxu0 %v339
      %454 = vmatprep.subr.mxu0 0.0
      %455 = vmatpush1.msra.mxu0 %v338
      %456 = vmatprep.subr.mxu0 0.0
      %457 = vmatpush1.msra.mxu0 %v337
      %458 = vmatprep.subr.mxu0 0.0
      %459 = vmatpush1.msra.mxu0 %v336
      %460 = vmatprep.subr.mxu0 0.0
      %461 = vmatpush1.msra.mxu0 %v335
      %462 = vmatprep.subr.mxu0 0.0
      %463 = vmatpush1.msra.mxu0 %v334
      %464 = vmatprep.subr.mxu0 0.0
      %465 = vmatpush1.msra.mxu0 %v333
      %466 = vmatprep.subr.mxu0 0.0
      %467 = vmatpush1.msra.mxu0 %v332
      %468 = vmatprep.subr.mxu0 0.0
      %469 = vmatpush1.msra.mxu0 %v331
      %470 = vmatprep.subr.mxu0 0.0
      %471 = vmatpush1.msra.mxu0 %v330
      %472 = vmatprep.subr.mxu0 0.0
      %473 = vmatpush1.msra.mxu0 %v329
      %474 = vmatprep.subr.mxu0 0.0
      %475 = vmatpush1.msra.mxu0 %v328
      %476 = vmatprep.subr.mxu0 0.0
      %477 = vmatpush2.msra.mxu0 0.0
      %478 = vmatprep.subr.mxu0 0.0
      %479 = vmatpush2.msra.mxu0 0.0
      %480 = vmatprep.subr.mxu0 0.0
      %481 = vmatpush2.msra.mxu0 0.0
      %482 = vmatprep.subr.mxu0 0.0
      %483 = vmatpush2.msra.mxu0 0.0
      %484 = vmatprep.subr.mxu0 0.0
      %485 = vmatpush2.msra.mxu0 0.0
      %486 = vmatprep.subr.mxu0 0.0
      %487 = vmatpush2.msra.mxu0 0.0
      %488 = vmatprep.subr.mxu0 0.0
      %489 = vmatpush2.msra.mxu0 0.0
      %490 = vmatprep.subr.mxu0 0.0
      %491 = vmatpush2.msra.mxu0 0.0
      %492 = vmatprep.subr.mxu0 0.0
      %493 = vmatpush2.msra.mxu0 0.0
      %494 = vmatprep.subr.mxu0 0.0
      %495 = vmatpush2.msra.mxu0 0.0
      %496 = vmatprep.subr.mxu0 0.0
      %497 = vmatpush2.msra.mxu0 0.0
      %498 = vmatprep.subr.mxu0 0.0
      %499 = vmatpush2.msra.mxu0 0.0
      %500 = vmatprep.subr.mxu0 0.0
      %501 = vmatpush2.msra.mxu0 0.0
      %502 = vmatprep.subr.mxu0 0.0
      %503 = vmatpush2.msra.mxu0 0.0
      %504 = vmatprep.subr.mxu0 0.0
      %505 = vmatpush2.msra.mxu0 0.0
      %506 = vmatprep.subr.mxu0 0.0
      %507 = vmatpush2.msra.mxu0 0.0
      %508 = vmatprep.mubr.f32.mxu0 0.0
      %509 = vmatmul.mubr.f32.gmra.mxu0 %v349
      %v510 = vpop.f32.mrf.mxu0
      %v511 = vadd.f32 %v345, %v510
      %v512 = vpop.f32.mrf.mxu0
      %513 = vmatprep.mubr.f32.mxu0 0.0
      %514 = vmatmul.mubr.f32.gmra.mxu0 %v352
      %v515 = vpop.f32.mrf.mxu0
      %v516 = vadd.f32 %v345, %v515
      %v517 = vpop.f32.mrf.mxu0
      %518 = vmatprep.mubr.f32.mxu0 0.0
      %519 = vmatmul.mubr.f32.gmra.mxu0 %v355
      %v520 = vpop.f32.mrf.mxu0
      %v521 = vadd.f32 %v345, %v520
      %v522 = vpop.f32.mrf.mxu0
      %523 = vmatprep.mubr.f32.mxu0 0.0
      %524 = vmatmul.mubr.f32.gmra.mxu0 %v358
      %v525 = vpop.f32.mrf.mxu0
      %v526 = vadd.f32 %v345, %v525
      %v527 = vpop.f32.mrf.mxu0
      %528 = vmatprep.mubr.f32.mxu0 0.0
      %529 = vmatmul.mubr.f32.gmra.mxu0 %v361
      %v530 = vpop.f32.mrf.mxu0
      %v531 = vadd.f32 %v345, %v530
      %v532 = vpop.f32.mrf.mxu0
      %533 = vmatprep.mubr.f32.mxu0 0.0
      %534 = vmatmul.mubr.f32.gmra.mxu0 %v364
      %v535 = vpop.f32.mrf.mxu0
      %v536 = vadd.f32 %v345, %v535
      %v537 = vpop.f32.mrf.mxu0
      %538 = vmatprep.mubr.f32.mxu0 0.0
      %539 = vmatmul.mubr.f32.gmra.mxu0 %v367
      %v540 = vpop.f32.mrf.mxu0
      %v541 = vadd.f32 %v345, %v540
      %v542 = vpop.f32.mrf.mxu0
      %543 = vmatprep.mubr.f32.mxu0 0.0
      %544 = vmatmul.mubr.f32.gmra.mxu0 %v370
      %v545 = vpop.f32.mrf.mxu0
      %v546 = vadd.f32 %v345, %v545
      %v547 = vpop.f32.mrf.mxu0
      %548 = vmatprep.mubr.f32.mxu0 0.0
      %549 = vmatmul.mubr.f32.gmra.mxu0 %v373
      %v550 = vpop.f32.mrf.mxu0
      %v551 = vadd.f32 %v345, %v550
      %v552 = vpop.f32.mrf.mxu0
      %553 = vmatprep.mubr.f32.mxu0 0.0
      %554 = vmatmul.mubr.f32.gmra.mxu0 %v376
      %v555 = vpop.f32.mrf.mxu0
      %v556 = vadd.f32 %v345, %v555
      %v557 = vpop.f32.mrf.mxu0
      %558 = vmatprep.mubr.f32.mxu0 0.0
      %559 = vmatmul.mubr.f32.gmra.mxu0 %v379
      %v560 = vpop.f32.mrf.mxu0
      %v561 = vadd.f32 %v345, %v560
      %v562 = vpop.f32.mrf.mxu0
      %563 = vmatprep.mubr.f32.mxu0 0.0
      %564 = vmatmul.mubr.f32.gmra.mxu0 %v382
      %v565 = vpop.f32.mrf.mxu0
      %v566 = vadd.f32 %v345, %v565
      %v567 = vpop.f32.mrf.mxu0
      %568 = vmatprep.mubr.f32.mxu0 0.0
      %569 = vmatmul.mubr.f32.gmra.mxu0 %v385
      %v570 = vpop.f32.mrf.mxu0
      %v571 = vadd.f32 %v345, %v570
      %v572 = vpop.f32.mrf.mxu0
      %573 = vmatprep.mubr.f32.mxu0 0.0
      %574 = vmatmul.mubr.f32.gmra.mxu0 %v388
      %v575 = vpop.f32.mrf.mxu0
      %v576 = vadd.f32 %v345, %v575
      %v577 = vpop.f32.mrf.mxu0
      %578 = vmatprep.mubr.f32.mxu0 0.0
      %579 = vmatmul.mubr.f32.gmra.mxu0 %v391
      %v580 = vpop.f32.mrf.mxu0
      %v581 = vadd.f32 %v345, %v580
      %v582 = vpop.f32.mrf.mxu0
      %583 = vmatprep.mubr.f32.mxu0 0.0
      %584 = vmatmul.mubr.f32.gmra.mxu0 %v394
      %v585 = vpop.f32.mrf.mxu0
      %v586 = vadd.f32 %v345, %v585
      %v587 = vpop.f32.mrf.mxu0
      %588 = vmatprep.mubr.f32.mxu0 0.0
      %589 = vmatmul.mubr.f32.gmra.mxu0 %v397
      %v590 = vpop.f32.mrf.mxu0
      %v591 = vadd.f32 %v345, %v590
      %v592 = vpop.f32.mrf.mxu0
      %593 = vmatprep.mubr.f32.mxu0 0.0
      %594 = vmatmul.mubr.f32.gmra.mxu0 %v400
      %v595 = vpop.f32.mrf.mxu0
      %v596 = vadd.f32 %v345, %v595
      %v597 = vpop.f32.mrf.mxu0
      %598 = vmatprep.mubr.f32.mxu0 0.0
      %599 = vmatmul.mubr.f32.gmra.mxu0 %v403
      %v600 = vpop.f32.mrf.mxu0
      %v601 = vadd.f32 %v345, %v600
      %v602 = vpop.f32.mrf.mxu0
      %603 = vmatprep.mubr.f32.mxu0 0.0
      %604 = vmatmul.mubr.f32.gmra.mxu0 %v406
      %v605 = vpop.f32.mrf.mxu0
      %v606 = vadd.f32 %v345, %v605
      %v607 = vpop.f32.mrf.mxu0
      %608 = vmatprep.mubr.f32.mxu0 0.0
      %609 = vmatmul.mubr.f32.gmra.mxu0 %v409
      %v610 = vpop.f32.mrf.mxu0
      %v611 = vadd.f32 %v345, %v610
      %v612 = vpop.f32.mrf.mxu0
      %613 = vmatprep.mubr.f32.mxu0 0.0
      %614 = vmatmul.mubr.f32.gmra.mxu0 %v412
      %v615 = vpop.f32.mrf.mxu0
      %v616 = vadd.f32 %v345, %v615
      %v617 = vpop.f32.mrf.mxu0
      %618 = vmatprep.mubr.f32.mxu0 0.0
      %619 = vmatmul.mubr.f32.gmra.mxu0 %v415
      %v620 = vpop.f32.mrf.mxu0
      %v621 = vadd.f32 %v345, %v620
      %v622 = vpop.f32.mrf.mxu0
      %623 = vmatprep.mubr.f32.mxu0 0.0
      %624 = vmatmul.mubr.f32.gmra.mxu0 %v418
      %v625 = vpop.f32.mrf.mxu0
      %v626 = vadd.f32 %v345, %v625
      %v627 = vpop.f32.mrf.mxu0
      %628 = vmatprep.mubr.f32.mxu0 0.0
      %629 = vmatmul.mubr.f32.gmra.mxu0 %v421
      %v630 = vpop.f32.mrf.mxu0
      %v631 = vadd.f32 %v345, %v630
      %v632 = vpop.f32.mrf.mxu0
      %633 = vmatprep.mubr.f32.mxu0 0.0
      %634 = vmatmul.mubr.f32.gmra.mxu0 %v424
      %v635 = vpop.f32.mrf.mxu0
      %v636 = vadd.f32 %v345, %v635
      %v637 = vpop.f32.mrf.mxu0
      %638 = vmatprep.mubr.f32.mxu0 0.0
      %639 = vmatmul.mubr.f32.gmra.mxu0 %v427
      %v640 = vpop.f32.mrf.mxu0
      %v641 = vadd.f32 %v345, %v640
      %v642 = vpop.f32.mrf.mxu0
      %643 = vmatprep.mubr.f32.mxu0 0.0
      %644 = vmatmul.mubr.f32.gmra.mxu0 %v430
      %v645 = vpop.f32.mrf.mxu0
      %v646 = vadd.f32 %v345, %v645
      %v647 = vpop.f32.mrf.mxu0
      %648 = vmatprep.mubr.f32.mxu0 0.0
      %649 = vmatmul.mubr.f32.gmra.mxu0 %v433
      %v650 = vpop.f32.mrf.mxu0
      %v651 = vadd.f32 %v345, %v650
      %v652 = vpop.f32.mrf.mxu0
      %653 = vmatprep.mubr.f32.mxu0 0.0
      %654 = vmatmul.mubr.f32.gmra.mxu0 %v436
      %v655 = vpop.f32.mrf.mxu0
      %v656 = vadd.f32 %v345, %v655
      %v657 = vpop.f32.mrf.mxu0
      %658 = vmatprep.mubr.f32.mxu0 0.0
      %659 = vmatmul.mubr.f32.gmra.mxu0 %v439
      %v660 = vpop.f32.mrf.mxu0
      %v661 = vadd.f32 %v345, %v660
      %v662 = vpop.f32.mrf.mxu0
      %663 = vmatprep.mubr.f32.mxu0 0.0
      %664 = vmatmul.mubr.f32.gmra.mxu0 %v442
      %v665 = vpop.f32.mrf.mxu0
      %v666 = vadd.f32 %v345, %v665
      %v667 = vpop.f32.mrf.mxu0
      %668 = vdwg.mxu0
      %vm669 = vcmp.ge.f32.partialorder %v511, 0.0
      %vm670 = vcmp.ge.f32.partialorder %v516, 0.0
      %vm671 = vcmp.ge.f32.partialorder %v521, 0.0
      %vm672 = vcmp.ge.f32.partialorder %v526, 0.0
      %vm673 = vcmp.ge.f32.partialorder %v531, 0.0
      %vm674 = vcmp.ge.f32.partialorder %v536, 0.0
      %vm675 = vcmp.ge.f32.partialorder %v541, 0.0
      %vm676 = vcmp.ge.f32.partialorder %v546, 0.0
      %vm677 = vcmp.ge.f32.partialorder %v551, 0.0
      %vm678 = vcmp.ge.f32.partialorder %v556, 0.0
      %vm679 = vcmp.ge.f32.partialorder %v561, 0.0
      %vm680 = vcmp.ge.f32.partialorder %v566, 0.0
      %vm681 = vcmp.ge.f32.partialorder %v571, 0.0
      %vm682 = vcmp.ge.f32.partialorder %v576, 0.0
      %vm683 = vcmp.ge.f32.partialorder %v581, 0.0
      %vm684 = vcmp.ge.f32.partialorder %v586, 0.0
      %vm685 = vcmp.ge.f32.partialorder %v591, 0.0
      %vm686 = vcmp.ge.f32.partialorder %v596, 0.0
      %vm687 = vcmp.ge.f32.partialorder %v601, 0.0
      %vm688 = vcmp.ge.f32.partialorder %v606, 0.0
      %vm689 = vcmp.ge.f32.partialorder %v611, 0.0
      %vm690 = vcmp.ge.f32.partialorder %v616, 0.0
      %vm691 = vcmp.ge.f32.partialorder %v621, 0.0
      %vm692 = vcmp.ge.f32.partialorder %v626, 0.0
      %vm693 = vcmp.ge.f32.partialorder %v631, 0.0
      %vm694 = vcmp.ge.f32.partialorder %v636, 0.0
      %vm695 = vcmp.ge.f32.partialorder %v641, 0.0
      %vm696 = vcmp.ge.f32.partialorder %v646, 0.0
      %vm697 = vcmp.ge.f32.partialorder %v651, 0.0
      %vm698 = vcmp.ge.f32.partialorder %v656, 0.0
      %vm699 = vcmp.ge.f32.partialorder %v661, 0.0
      %vm700 = vcmp.ge.f32.partialorder %v666, 0.0
      %v701 = vmul.f32 %v511, 0.2
      %v702 = vmul.f32 %v516, 0.2
      %v703 = vmul.f32 %v521, 0.2
      %v704 = vmul.f32 %v526, 0.2
      %v705 = vmul.f32 %v531, 0.2
      %v706 = vmul.f32 %v536, 0.2
      %v707 = vmul.f32 %v541, 0.2
      %v708 = vmul.f32 %v546, 0.2
      %v709 = vmul.f32 %v551, 0.2
      %v710 = vmul.f32 %v556, 0.2
      %v711 = vmul.f32 %v561, 0.2
      %v712 = vmul.f32 %v566, 0.2
      %v713 = vmul.f32 %v571, 0.2
      %v714 = vmul.f32 %v576, 0.2
      %v715 = vmul.f32 %v581, 0.2
      %v716 = vmul.f32 %v586, 0.2
      %v717 = vmul.f32 %v591, 0.2
      %v718 = vmul.f32 %v596, 0.2
      %v719 = vmul.f32 %v601, 0.2
      %v720 = vmul.f32 %v606, 0.2
      %v721 = vmul.f32 %v611, 0.2
      %v722 = vmul.f32 %v616, 0.2
      %v723 = vmul.f32 %v621, 0.2
      %v724 = vmul.f32 %v626, 0.2
      %v725 = vmul.f32 %v631, 0.2
      %v726 = vmul.f32 %v636, 0.2
      %v727 = vmul.f32 %v641, 0.2
      %v728 = vmul.f32 %v646, 0.2
      %v729 = vmul.f32 %v651, 0.2
      %v730 = vmul.f32 %v656, 0.2
      %v731 = vmul.f32 %v661, 0.2
      %v732 = vmul.f32 %v666, 0.2
      %v733 = vsel %vm669, %v511, %v701
      %v734 = vsel %vm670, %v516, %v702
      %v735 = vsel %vm671, %v521, %v703
      %v736 = vsel %vm672, %v526, %v704
      %v737 = vsel %vm673, %v531, %v705
      %v738 = vsel %vm674, %v536, %v706
      %v739 = vsel %vm675, %v541, %v707
      %v740 = vsel %vm676, %v546, %v708
      %v741 = vsel %vm677, %v551, %v709
      %v742 = vsel %vm678, %v556, %v710
      %v743 = vsel %vm679, %v561, %v711
      %v744 = vsel %vm680, %v566, %v712
      %v745 = vsel %vm681, %v571, %v713
      %v746 = vsel %vm682, %v576, %v714
      %v747 = vsel %vm683, %v581, %v715
      %v748 = vsel %vm684, %v586, %v716
      %v749 = vsel %vm685, %v591, %v717
      %v750 = vsel %vm686, %v596, %v718
      %v751 = vsel %vm687, %v601, %v719
      %v752 = vsel %vm688, %v606, %v720
      %v753 = vsel %vm689, %v611, %v721
      %v754 = vsel %vm690, %v616, %v722
      %v755 = vsel %vm691, %v621, %v723
      %v756 = vsel %vm692, %v626, %v724
      %v757 = vsel %vm693, %v631, %v725
      %v758 = vsel %vm694, %v636, %v726
      %v759 = vsel %vm695, %v641, %v727
      %v760 = vsel %vm696, %v646, %v728
      %v761 = vsel %vm697, %v651, %v729
      %v762 = vsel %vm698, %v656, %v730
      %v763 = vsel %vm699, %v661, %v731
      %v764 = vsel %vm700, %v666, %v732
      %v765 = vld [vmem:[%s5] sm:$0xff]
      %v766 = vld [vmem:[%s5 + $0x8] sm:$0xff]
      %v767 = vld [vmem:[%s5 + $0x10] sm:$0xff]
      %v768 = vld [vmem:[%s5 + $0x18] sm:$0xff]
      %vm769 = vcmask 261120
      %v771 = vsel %vm769, %v733, 0
      %v774 = vsel %vm769, %v734, 0
      %v777 = vsel %vm769, %v735, 0
      %v780 = vsel %vm769, %v736, 0
      %v783 = vsel %vm769, %v737, 0
      %v786 = vsel %vm769, %v738, 0
      %v789 = vsel %vm769, %v739, 0
      %v792 = vsel %vm769, %v740, 0
      %v795 = vsel %vm769, %v741, 0
      %v798 = vsel %vm769, %v742, 0
      %v801 = vsel %vm769, %v743, 0
      %v804 = vsel %vm769, %v744, 0
      %v807 = vsel %vm769, %v745, 0
      %v810 = vsel %vm769, %v746, 0
      %v813 = vsel %vm769, %v747, 0
      %v816 = vsel %vm769, %v748, 0
      %v819 = vsel %vm769, %v749, 0
      %v822 = vsel %vm769, %v750, 0
      %v825 = vsel %vm769, %v751, 0
      %v828 = vsel %vm769, %v752, 0
      %v831 = vsel %vm769, %v753, 0
      %v834 = vsel %vm769, %v754, 0
      %v837 = vsel %vm769, %v755, 0
      %v840 = vsel %vm769, %v756, 0
      %v843 = vsel %vm769, %v757, 0
      %v846 = vsel %vm769, %v758, 0
      %v849 = vsel %vm769, %v759, 0
      %v852 = vsel %vm769, %v760, 0
      %v855 = vsel %vm769, %v761, 0
      %v858 = vsel %vm769, %v762, 0
      %v861 = vsel %vm769, %v763, 0
      %v864 = vsel %vm769, %v764, 0
      %866 = vmatprep.subr.mxu0 0.0
      %867 = vmatpush1.msra.mxu0 0.0
      %868 = vmatprep.subr.mxu0 0.0
      %869 = vmatpush1.msra.mxu0 0.0
      %870 = vmatprep.subr.mxu0 0.0
      %871 = vmatpush1.msra.mxu0 0.0
      %872 = vmatprep.subr.mxu0 0.0
      %873 = vmatpush1.msra.mxu0 0.0
      %874 = vmatprep.subr.mxu0 0.0
      %875 = vmatpush1.msra.mxu0 0.0
      %876 = vmatprep.subr.mxu0 0.0
      %877 = vmatpush1.msra.mxu0 0.0
      %878 = vmatprep.subr.mxu0 0.0
      %879 = vmatpush1.msra.mxu0 0.0
      %880 = vmatprep.subr.mxu0 0.0
      %881 = vmatpush1.msra.mxu0 0.0
      %882 = vmatprep.subr.mxu0 0.0
      %883 = vmatpush1.msra.mxu0 0.0
      %884 = vmatprep.subr.mxu0 0.0
      %885 = vmatpush1.msra.mxu0 0.0
      %886 = vmatprep.subr.mxu0 0.0
      %887 = vmatpush1.msra.mxu0 0.0
      %888 = vmatprep.subr.mxu0 0.0
      %889 = vmatpush1.msra.mxu0 0.0
      %890 = vmatprep.subr.mxu0 0.0
      %891 = vmatpush1.msra.mxu0 %v768
      %892 = vmatprep.subr.mxu0 0.0
      %893 = vmatpush1.msra.mxu0 %v767
      %894 = vmatprep.subr.mxu0 0.0
      %895 = vmatpush1.msra.mxu0 %v766
      %896 = vmatprep.subr.mxu0 0.0
      %897 = vmatpush1.msra.mxu0 %v765
      %898 = vmatprep.subr.mxu0 0.0
      %899 = vmatpush2.msra.mxu0 0.0
      %900 = vmatprep.subr.mxu0 0.0
      %901 = vmatpush2.msra.mxu0 0.0
      %902 = vmatprep.subr.mxu0 0.0
      %903 = vmatpush2.msra.mxu0 0.0
      %904 = vmatprep.subr.mxu0 0.0
      %905 = vmatpush2.msra.mxu0 0.0
      %906 = vmatprep.subr.mxu0 0.0
      %907 = vmatpush2.msra.mxu0 0.0
      %908 = vmatprep.subr.mxu0 0.0
      %909 = vmatpush2.msra.mxu0 0.0
      %910 = vmatprep.subr.mxu0 0.0
      %911 = vmatpush2.msra.mxu0 0.0
      %912 = vmatprep.subr.mxu0 0.0
      %913 = vmatpush2.msra.mxu0 0.0
      %914 = vmatprep.subr.mxu0 0.0
      %915 = vmatpush2.msra.mxu0 0.0
      %916 = vmatprep.subr.mxu0 0.0
      %917 = vmatpush2.msra.mxu0 0.0
      %918 = vmatprep.subr.mxu0 0.0
      %919 = vmatpush2.msra.mxu0 0.0
      %920 = vmatprep.subr.mxu0 0.0
      %921 = vmatpush2.msra.mxu0 0.0
      %922 = vmatprep.subr.mxu0 0.0
      %923 = vmatpush2.msra.mxu0 0.0
      %924 = vmatprep.subr.mxu0 0.0
      %925 = vmatpush2.msra.mxu0 0.0
      %926 = vmatprep.subr.mxu0 0.0
      %927 = vmatpush2.msra.mxu0 0.0
      %928 = vmatprep.subr.mxu0 0.0
      %929 = vmatpush2.msra.mxu0 0.0
      %930 = vmatprep.mubr.f32.mxu0 0.0
      %931 = vmatmul.mubr.f32.gmra.mxu0 %v771
      %v932 = vpop.f32.mrf.mxu0
      %v933 = vadd.f32 0.0, %v932
      %v934 = vpop.f32.mrf.mxu0
      %935 = vmatprep.mubr.f32.mxu0 0.0
      %936 = vmatmul.mubr.f32.gmra.mxu0 %v774
      %v937 = vpop.f32.mrf.mxu0
      %v938 = vadd.f32 0.0, %v937
      %v939 = vpop.f32.mrf.mxu0
      %940 = vmatprep.mubr.f32.mxu0 0.0
      %941 = vmatmul.mubr.f32.gmra.mxu0 %v777
      %v942 = vpop.f32.mrf.mxu0
      %v943 = vadd.f32 0.0, %v942
      %v944 = vpop.f32.mrf.mxu0
      %945 = vmatprep.mubr.f32.mxu0 0.0
      %946 = vmatmul.mubr.f32.gmra.mxu0 %v780
      %v947 = vpop.f32.mrf.mxu0
      %v948 = vadd.f32 0.0, %v947
      %v949 = vpop.f32.mrf.mxu0
      %950 = vmatprep.mubr.f32.mxu0 0.0
      %951 = vmatmul.mubr.f32.gmra.mxu0 %v783
      %v952 = vpop.f32.mrf.mxu0
      %v953 = vadd.f32 0.0, %v952
      %v954 = vpop.f32.mrf.mxu0
      %955 = vmatprep.mubr.f32.mxu0 0.0
      %956 = vmatmul.mubr.f32.gmra.mxu0 %v786
      %v957 = vpop.f32.mrf.mxu0
      %v958 = vadd.f32 0.0, %v957
      %v959 = vpop.f32.mrf.mxu0
      %960 = vmatprep.mubr.f32.mxu0 0.0
      %961 = vmatmul.mubr.f32.gmra.mxu0 %v789
      %v962 = vpop.f32.mrf.mxu0
      %v963 = vadd.f32 0.0, %v962
      %v964 = vpop.f32.mrf.mxu0
      %965 = vmatprep.mubr.f32.mxu0 0.0
      %966 = vmatmul.mubr.f32.gmra.mxu0 %v792
      %v967 = vpop.f32.mrf.mxu0
      %v968 = vadd.f32 0.0, %v967
      %v969 = vpop.f32.mrf.mxu0
      %970 = vmatprep.mubr.f32.mxu0 0.0
      %971 = vmatmul.mubr.f32.gmra.mxu0 %v795
      %v972 = vpop.f32.mrf.mxu0
      %v973 = vadd.f32 0.0, %v972
      %v974 = vpop.f32.mrf.mxu0
      %975 = vmatprep.mubr.f32.mxu0 0.0
      %976 = vmatmul.mubr.f32.gmra.mxu0 %v798
      %v977 = vpop.f32.mrf.mxu0
      %v978 = vadd.f32 0.0, %v977
      %v979 = vpop.f32.mrf.mxu0
      %980 = vmatprep.mubr.f32.mxu0 0.0
      %981 = vmatmul.mubr.f32.gmra.mxu0 %v801
      %v982 = vpop.f32.mrf.mxu0
      %v983 = vadd.f32 0.0, %v982
      %v984 = vpop.f32.mrf.mxu0
      %985 = vmatprep.mubr.f32.mxu0 0.0
      %986 = vmatmul.mubr.f32.gmra.mxu0 %v804
      %v987 = vpop.f32.mrf.mxu0
      %v988 = vadd.f32 0.0, %v987
      %v989 = vpop.f32.mrf.mxu0
      %990 = vmatprep.mubr.f32.mxu0 0.0
      %991 = vmatmul.mubr.f32.gmra.mxu0 %v807
      %v992 = vpop.f32.mrf.mxu0
      %v993 = vadd.f32 0.0, %v992
      %v994 = vpop.f32.mrf.mxu0
      %995 = vmatprep.mubr.f32.mxu0 0.0
      %996 = vmatmul.mubr.f32.gmra.mxu0 %v810
      %v997 = vpop.f32.mrf.mxu0
      %v998 = vadd.f32 0.0, %v997
      %v999 = vpop.f32.mrf.mxu0
      %1000 = vmatprep.mubr.f32.mxu0 0.0
      %1001 = vmatmul.mubr.f32.gmra.mxu0 %v813
      %v1002 = vpop.f32.mrf.mxu0
      %v1003 = vadd.f32 0.0, %v1002
      %v1004 = vpop.f32.mrf.mxu0
      %1005 = vmatprep.mubr.f32.mxu0 0.0
      %1006 = vmatmul.mubr.f32.gmra.mxu0 %v816
      %v1007 = vpop.f32.mrf.mxu0
      %v1008 = vadd.f32 0.0, %v1007
      %v1009 = vpop.f32.mrf.mxu0
      %1010 = vmatprep.mubr.f32.mxu0 0.0
      %1011 = vmatmul.mubr.f32.gmra.mxu0 %v819
      %v1012 = vpop.f32.mrf.mxu0
      %v1013 = vadd.f32 0.0, %v1012
      %v1014 = vpop.f32.mrf.mxu0
      %1015 = vmatprep.mubr.f32.mxu0 0.0
      %1016 = vmatmul.mubr.f32.gmra.mxu0 %v822
      %v1017 = vpop.f32.mrf.mxu0
      %v1018 = vadd.f32 0.0, %v1017
      %v1019 = vpop.f32.mrf.mxu0
      %1020 = vmatprep.mubr.f32.mxu0 0.0
      %1021 = vmatmul.mubr.f32.gmra.mxu0 %v825
      %v1022 = vpop.f32.mrf.mxu0
      %v1023 = vadd.f32 0.0, %v1022
      %v1024 = vpop.f32.mrf.mxu0
      %1025 = vmatprep.mubr.f32.mxu0 0.0
      %1026 = vmatmul.mubr.f32.gmra.mxu0 %v828
      %v1027 = vpop.f32.mrf.mxu0
      %v1028 = vadd.f32 0.0, %v1027
      %v1029 = vpop.f32.mrf.mxu0
      %1030 = vmatprep.mubr.f32.mxu0 0.0
      %1031 = vmatmul.mubr.f32.gmra.mxu0 %v831
      %v1032 = vpop.f32.mrf.mxu0
      %v1033 = vadd.f32 0.0, %v1032
      %v1034 = vpop.f32.mrf.mxu0
      %1035 = vmatprep.mubr.f32.mxu0 0.0
      %1036 = vmatmul.mubr.f32.gmra.mxu0 %v834
      %v1037 = vpop.f32.mrf.mxu0
      %v1038 = vadd.f32 0.0, %v1037
      %v1039 = vpop.f32.mrf.mxu0
      %1040 = vmatprep.mubr.f32.mxu0 0.0
      %1041 = vmatmul.mubr.f32.gmra.mxu0 %v837
      %v1042 = vpop.f32.mrf.mxu0
      %v1043 = vadd.f32 0.0, %v1042
      %v1044 = vpop.f32.mrf.mxu0
      %1045 = vmatprep.mubr.f32.mxu0 0.0
      %1046 = vmatmul.mubr.f32.gmra.mxu0 %v840
      %v1047 = vpop.f32.mrf.mxu0
      %v1048 = vadd.f32 0.0, %v1047
      %v1049 = vpop.f32.mrf.mxu0
      %1050 = vmatprep.mubr.f32.mxu0 0.0
      %1051 = vmatmul.mubr.f32.gmra.mxu0 %v843
      %v1052 = vpop.f32.mrf.mxu0
      %v1053 = vadd.f32 0.0, %v1052
      %v1054 = vpop.f32.mrf.mxu0
      %1055 = vmatprep.mubr.f32.mxu0 0.0
      %1056 = vmatmul.mubr.f32.gmra.mxu0 %v846
      %v1057 = vpop.f32.mrf.mxu0
      %v1058 = vadd.f32 0.0, %v1057
      %v1059 = vpop.f32.mrf.mxu0
      %1060 = vmatprep.mubr.f32.mxu0 0.0
      %1061 = vmatmul.mubr.f32.gmra.mxu0 %v849
      %v1062 = vpop.f32.mrf.mxu0
      %v1063 = vadd.f32 0.0, %v1062
      %v1064 = vpop.f32.mrf.mxu0
      %1065 = vmatprep.mubr.f32.mxu0 0.0
      %1066 = vmatmul.mubr.f32.gmra.mxu0 %v852
      %v1067 = vpop.f32.mrf.mxu0
      %v1068 = vadd.f32 0.0, %v1067
      %v1069 = vpop.f32.mrf.mxu0
      %1070 = vmatprep.mubr.f32.mxu0 0.0
      %1071 = vmatmul.mubr.f32.gmra.mxu0 %v855
      %v1072 = vpop.f32.mrf.mxu0
      %v1073 = vadd.f32 0.0, %v1072
      %v1074 = vpop.f32.mrf.mxu0
      %1075 = vmatprep.mubr.f32.mxu0 0.0
      %1076 = vmatmul.mubr.f32.gmra.mxu0 %v858
      %v1077 = vpop.f32.mrf.mxu0
      %v1078 = vadd.f32 0.0, %v1077
      %v1079 = vpop.f32.mrf.mxu0
      %1080 = vmatprep.mubr.f32.mxu0 0.0
      %1081 = vmatmul.mubr.f32.gmra.mxu0 %v861
      %v1082 = vpop.f32.mrf.mxu0
      %v1083 = vadd.f32 0.0, %v1082
      %v1084 = vpop.f32.mrf.mxu0
      %1085 = vmatprep.mubr.f32.mxu0 0.0
      %1086 = vmatmul.mubr.f32.gmra.mxu0 %v864
      %v1087 = vpop.f32.mrf.mxu0
      %v1088 = vadd.f32 0.0, %v1087
      %v1089 = vpop.f32.mrf.mxu0
      %1090 = vdwg.mxu0
      %s1091 = smul.u32 %s19, 256
      %v1092 = vlaneseq
      %v1093 = vshrl.u32 %v1092, 7
      %v1094 = vadd.s32 %v1093, 8
      %v1095 = vadd.s32 %v1093, 16
      %v1096 = vadd.s32 %v1093, 24
      %v1097 = vadd.s32 %v1093, 32
      %v1098 = vadd.s32 %v1093, 40
      %v1099 = vadd.s32 %v1093, 48
      %v1100 = vadd.s32 %v1093, 56
      %v1101 = vadd.s32 %v1093, 64
      %v1102 = vadd.s32 %v1093, 72
      %v1103 = vadd.s32 %v1093, 80
      %v1104 = vadd.s32 %v1093, 88
      %v1105 = vadd.s32 %v1093, 96
      %v1106 = vadd.s32 %v1093, 104
      %v1107 = vadd.s32 %v1093, 112
      %v1108 = vadd.s32 %v1093, 120
      %v1109 = vadd.s32 %v1093, 128
      %v1110 = vadd.s32 %v1093, 136
      %v1111 = vadd.s32 %v1093, 144
      %v1112 = vadd.s32 %v1093, 152
      %v1113 = vadd.s32 %v1093, 160
      %v1114 = vadd.s32 %v1093, 168
      %v1115 = vadd.s32 %v1093, 176
      %v1116 = vadd.s32 %v1093, 184
      %v1117 = vadd.s32 %v1093, 192
      %v1118 = vadd.s32 %v1093, 200
      %v1119 = vadd.s32 %v1093, 208
      %v1120 = vadd.s32 %v1093, 216
      %v1121 = vadd.s32 %v1093, 224
      %v1122 = vadd.s32 %v1093, 232
      %v1123 = vadd.s32 %v1093, 240
      %v1124 = vadd.s32 %v1093, 248
      %v1125 = vstv %s1091
      %v1126 = vadd.s32 %v1125, %v1093
      %v1127 = vadd.s32 %v1125, %v1094
      %v1128 = vadd.s32 %v1125, %v1095
      %v1129 = vadd.s32 %v1125, %v1096
      %v1130 = vadd.s32 %v1125, %v1097
      %v1131 = vadd.s32 %v1125, %v1098
      %v1132 = vadd.s32 %v1125, %v1099
      %v1133 = vadd.s32 %v1125, %v1100
      %v1134 = vadd.s32 %v1125, %v1101
      %v1135 = vadd.s32 %v1125, %v1102
      %v1136 = vadd.s32 %v1125, %v1103
      %v1137 = vadd.s32 %v1125, %v1104
      %v1138 = vadd.s32 %v1125, %v1105
      %v1139 = vadd.s32 %v1125, %v1106
      %v1140 = vadd.s32 %v1125, %v1107
      %v1141 = vadd.s32 %v1125, %v1108
      %v1142 = vadd.s32 %v1125, %v1109
      %v1143 = vadd.s32 %v1125, %v1110
      %v1144 = vadd.s32 %v1125, %v1111
      %v1145 = vadd.s32 %v1125, %v1112
      %v1146 = vadd.s32 %v1125, %v1113
      %v1147 = vadd.s32 %v1125, %v1114
      %v1148 = vadd.s32 %v1125, %v1115
      %v1149 = vadd.s32 %v1125, %v1116
      %v1150 = vadd.s32 %v1125, %v1117
      %v1151 = vadd.s32 %v1125, %v1118
      %v1152 = vadd.s32 %v1125, %v1119
      %v1153 = vadd.s32 %v1125, %v1120
      %v1154 = vadd.s32 %v1125, %v1121
      %v1155 = vadd.s32 %v1125, %v1122
      %v1156 = vadd.s32 %v1125, %v1123
      %v1157 = vadd.s32 %v1125, %v1124
      %vm1158 = vcmp.lt.s32.totalorder %v1126, 266
      %vm1159 = vcmp.lt.s32.totalorder %v1127, 266
      %vm1160 = vcmp.lt.s32.totalorder %v1128, 266
      %vm1161 = vcmp.lt.s32.totalorder %v1129, 266
      %vm1162 = vcmp.lt.s32.totalorder %v1130, 266
      %vm1163 = vcmp.lt.s32.totalorder %v1131, 266
      %vm1164 = vcmp.lt.s32.totalorder %v1132, 266
      %vm1165 = vcmp.lt.s32.totalorder %v1133, 266
      %vm1166 = vcmp.lt.s32.totalorder %v1134, 266
      %vm1167 = vcmp.lt.s32.totalorder %v1135, 266
      %vm1168 = vcmp.lt.s32.totalorder %v1136, 266
      %vm1169 = vcmp.lt.s32.totalorder %v1137, 266
      %vm1170 = vcmp.lt.s32.totalorder %v1138, 266
      %vm1171 = vcmp.lt.s32.totalorder %v1139, 266
      %vm1172 = vcmp.lt.s32.totalorder %v1140, 266
      %vm1173 = vcmp.lt.s32.totalorder %v1141, 266
      %vm1174 = vcmp.lt.s32.totalorder %v1142, 266
      %vm1175 = vcmp.lt.s32.totalorder %v1143, 266
      %vm1176 = vcmp.lt.s32.totalorder %v1144, 266
      %vm1177 = vcmp.lt.s32.totalorder %v1145, 266
      %vm1178 = vcmp.lt.s32.totalorder %v1146, 266
      %vm1179 = vcmp.lt.s32.totalorder %v1147, 266
      %vm1180 = vcmp.lt.s32.totalorder %v1148, 266
      %vm1181 = vcmp.lt.s32.totalorder %v1149, 266
      %vm1182 = vcmp.lt.s32.totalorder %v1150, 266
      %vm1183 = vcmp.lt.s32.totalorder %v1151, 266
      %vm1184 = vcmp.lt.s32.totalorder %v1152, 266
      %vm1185 = vcmp.lt.s32.totalorder %v1153, 266
      %vm1186 = vcmp.lt.s32.totalorder %v1154, 266
      %vm1187 = vcmp.lt.s32.totalorder %v1155, 266
      %vm1188 = vcmp.lt.s32.totalorder %v1156, 266
      %vm1189 = vcmp.lt.s32.totalorder %v1157, 266
      %v1190 = vsel %vm1158, %v933, -1e+30
      %v1191 = vsel %vm1159, %v938, -1e+30
      %v1192 = vsel %vm1160, %v943, -1e+30
      %v1193 = vsel %vm1161, %v948, -1e+30
      %v1194 = vsel %vm1162, %v953, -1e+30
      %v1195 = vsel %vm1163, %v958, -1e+30
      %v1196 = vsel %vm1164, %v963, -1e+30
      %v1197 = vsel %vm1165, %v968, -1e+30
      %v1198 = vsel %vm1166, %v973, -1e+30
      %v1199 = vsel %vm1167, %v978, -1e+30
      %v1200 = vsel %vm1168, %v983, -1e+30
      %v1201 = vsel %vm1169, %v988, -1e+30
      %v1202 = vsel %vm1170, %v993, -1e+30
      %v1203 = vsel %vm1171, %v998, -1e+30
      %v1204 = vsel %vm1172, %v1003, -1e+30
      %v1205 = vsel %vm1173, %v1008, -1e+30
      %v1206 = vsel %vm1174, %v1013, -1e+30
      %v1207 = vsel %vm1175, %v1018, -1e+30
      %v1208 = vsel %vm1176, %v1023, -1e+30
      %v1209 = vsel %vm1177, %v1028, -1e+30
      %v1210 = vsel %vm1178, %v1033, -1e+30
      %v1211 = vsel %vm1179, %v1038, -1e+30
      %v1212 = vsel %vm1180, %v1043, -1e+30
      %v1213 = vsel %vm1181, %v1048, -1e+30
      %v1214 = vsel %vm1182, %v1053, -1e+30
      %v1215 = vsel %vm1183, %v1058, -1e+30
      %v1216 = vsel %vm1184, %v1063, -1e+30
      %v1217 = vsel %vm1185, %v1068, -1e+30
      %v1218 = vsel %vm1186, %v1073, -1e+30
      %v1219 = vsel %vm1187, %v1078, -1e+30
      %v1220 = vsel %vm1188, %v1083, -1e+30
      %v1221 = vsel %vm1189, %v1088, -1e+30
      %vm1222 = vcmask 64512
      %1223 = vst.msk [vmem:[%s288] sm:$0xff] %vm1222, %v1190
      %1224 = vst.msk [vmem:[%s288 + $0x8] sm:$0xff] %vm1222, %v1191
      %1225 = vst.msk [vmem:[%s288 + $0x10] sm:$0xff] %vm1222, %v1192
      %1226 = vst.msk [vmem:[%s288 + $0x18] sm:$0xff] %vm1222, %v1193
      %1227 = vst.msk [vmem:[%s288 + $0x20] sm:$0xff] %vm1222, %v1194
      %1228 = vst.msk [vmem:[%s288 + $0x28] sm:$0xff] %vm1222, %v1195
      %1229 = vst.msk [vmem:[%s288 + $0x30] sm:$0xff] %vm1222, %v1196
      %1230 = vst.msk [vmem:[%s288 + $0x38] sm:$0xff] %vm1222, %v1197
      %1231 = vst.msk [vmem:[%s288 + $0x40] sm:$0xff] %vm1222, %v1198
      %1232 = vst.msk [vmem:[%s288 + $0x48] sm:$0xff] %vm1222, %v1199
      %1233 = vst.msk [vmem:[%s288 + $0x50] sm:$0xff] %vm1222, %v1200
      %1234 = vst.msk [vmem:[%s288 + $0x58] sm:$0xff] %vm1222, %v1201
      %1235 = vst.msk [vmem:[%s288 + $0x60] sm:$0xff] %vm1222, %v1202
      %1236 = vst.msk [vmem:[%s288 + $0x68] sm:$0xff] %vm1222, %v1203
      %1237 = vst.msk [vmem:[%s288 + $0x70] sm:$0xff] %vm1222, %v1204
      %1238 = vst.msk [vmem:[%s288 + $0x78] sm:$0xff] %vm1222, %v1205
      %1239 = vst.msk [vmem:[%s288 + $0x80] sm:$0xff] %vm1222, %v1206
      %1240 = vst.msk [vmem:[%s288 + $0x88] sm:$0xff] %vm1222, %v1207
      %1241 = vst.msk [vmem:[%s288 + $0x90] sm:$0xff] %vm1222, %v1208
      %1242 = vst.msk [vmem:[%s288 + $0x98] sm:$0xff] %vm1222, %v1209
      %1243 = vst.msk [vmem:[%s288 + $0xa0] sm:$0xff] %vm1222, %v1210
      %1244 = vst.msk [vmem:[%s288 + $0xa8] sm:$0xff] %vm1222, %v1211
      %1245 = vst.msk [vmem:[%s288 + $0xb0] sm:$0xff] %vm1222, %v1212
      %1246 = vst.msk [vmem:[%s288 + $0xb8] sm:$0xff] %vm1222, %v1213
      %1247 = vst.msk [vmem:[%s288 + $0xc0] sm:$0xff] %vm1222, %v1214
      %1248 = vst.msk [vmem:[%s288 + $0xc8] sm:$0xff] %vm1222, %v1215
      %1249 = vst.msk [vmem:[%s288 + $0xd0] sm:$0xff] %vm1222, %v1216
      %1250 = vst.msk [vmem:[%s288 + $0xd8] sm:$0xff] %vm1222, %v1217
      %1251 = vst.msk [vmem:[%s288 + $0xe0] sm:$0xff] %vm1222, %v1218
      %1252 = vst.msk [vmem:[%s288 + $0xe8] sm:$0xff] %vm1222, %v1219
      %1253 = vst.msk [vmem:[%s288 + $0xf0] sm:$0xff] %vm1222, %v1220
      %1254 = vst.msk [vmem:[%s288 + $0xf8] sm:$0xff] %vm1222, %v1221
      %v1255 = vld [vmem:[%s3] sm:$0xff]
      %v1256 = vld [vmem:[%s3 + $0x8] sm:$0xff]
      %v1257 = vld [vmem:[%s3 + $0x10] sm:$0xff]
      %v1258 = vld [vmem:[%s3 + $0x18] sm:$0xff]
      %v1259 = vld [vmem:[%s3 + $0x20] sm:$0xff]
      %v1260 = vld [vmem:[%s3 + $0x28] sm:$0xff]
      %v1261 = vld [vmem:[%s3 + $0x30] sm:$0xff]
      %v1262 = vld [vmem:[%s3 + $0x38] sm:$0xff]
      %v1263 = vld [vmem:[%s3 + $0x40] sm:$0xff]
      %v1264 = vld [vmem:[%s3 + $0x48] sm:$0xff]
      %v1265 = vld [vmem:[%s3 + $0x50] sm:$0xff]
      %v1266 = vld [vmem:[%s3 + $0x58] sm:$0xff]
      %v1267 = vld [vmem:[%s4] sm:$0x1]
      %v1269 = vlaneseq
      %v1270 = vshrl.u32 %v1269, 7
      %v1271 = vsub.s32 0, %v1270
      %v1272 = vrot.slane %v1267, %v1271
      %1274 = vmatprep.subr.mxu0 0.0
      %1275 = vmatpush1.msra.mxu0 0.0
      %1276 = vmatprep.subr.mxu0 0.0
      %1277 = vmatpush1.msra.mxu0 0.0
      %1278 = vmatprep.subr.mxu0 0.0
      %1279 = vmatpush1.msra.mxu0 0.0
      %1280 = vmatprep.subr.mxu0 0.0
      %1281 = vmatpush1.msra.mxu0 0.0
      %1282 = vmatprep.subr.mxu0 0.0
      %1283 = vmatpush1.msra.mxu0 %v1266
      %1284 = vmatprep.subr.mxu0 0.0
      %1285 = vmatpush1.msra.mxu0 %v1265
      %1286 = vmatprep.subr.mxu0 0.0
      %1287 = vmatpush1.msra.mxu0 %v1264
      %1288 = vmatprep.subr.mxu0 0.0
      %1289 = vmatpush1.msra.mxu0 %v1263
      %1290 = vmatprep.subr.mxu0 0.0
      %1291 = vmatpush1.msra.mxu0 %v1262
      %1292 = vmatprep.subr.mxu0 0.0
      %1293 = vmatpush1.msra.mxu0 %v1261
      %1294 = vmatprep.subr.mxu0 0.0
      %1295 = vmatpush1.msra.mxu0 %v1260
      %1296 = vmatprep.subr.mxu0 0.0
      %1297 = vmatpush1.msra.mxu0 %v1259
      %1298 = vmatprep.subr.mxu0 0.0
      %1299 = vmatpush1.msra.mxu0 %v1258
      %1300 = vmatprep.subr.mxu0 0.0
      %1301 = vmatpush1.msra.mxu0 %v1257
      %1302 = vmatprep.subr.mxu0 0.0
      %1303 = vmatpush1.msra.mxu0 %v1256
      %1304 = vmatprep.subr.mxu0 0.0
      %1305 = vmatpush1.msra.mxu0 %v1255
      %1306 = vmatprep.subr.mxu0 0.0
      %1307 = vmatpush2.msra.mxu0 0.0
      %1308 = vmatprep.subr.mxu0 0.0
      %1309 = vmatpush2.msra.mxu0 0.0
      %1310 = vmatprep.subr.mxu0 0.0
      %1311 = vmatpush2.msra.mxu0 0.0
      %1312 = vmatprep.subr.mxu0 0.0
      %1313 = vmatpush2.msra.mxu0 0.0
      %1314 = vmatprep.subr.mxu0 0.0
      %1315 = vmatpush2.msra.mxu0 0.0
      %1316 = vmatprep.subr.mxu0 0.0
      %1317 = vmatpush2.msra.mxu0 0.0
      %1318 = vmatprep.subr.mxu0 0.0
      %1319 = vmatpush2.msra.mxu0 0.0
      %1320 = vmatprep.subr.mxu0 0.0
      %1321 = vmatpush2.msra.mxu0 0.0
      %1322 = vmatprep.subr.mxu0 0.0
      %1323 = vmatpush2.msra.mxu0 0.0
      %1324 = vmatprep.subr.mxu0 0.0
      %1325 = vmatpush2.msra.mxu0 0.0
      %1326 = vmatprep.subr.mxu0 0.0
      %1327 = vmatpush2.msra.mxu0 0.0
      %1328 = vmatprep.subr.mxu0 0.0
      %1329 = vmatpush2.msra.mxu0 0.0
      %1330 = vmatprep.subr.mxu0 0.0
      %1331 = vmatpush2.msra.mxu0 0.0
      %1332 = vmatprep.subr.mxu0 0.0
      %1333 = vmatpush2.msra.mxu0 0.0
      %1334 = vmatprep.subr.mxu0 0.0
      %1335 = vmatpush2.msra.mxu0 0.0
      %1336 = vmatprep.subr.mxu0 0.0
      %1337 = vmatpush2.msra.mxu0 0.0
      %1338 = vmatprep.mubr.f32.mxu0 0.0
      %1339 = vmatmul.mubr.f32.gmra.mxu0 %v349
      %v1340 = vpop.f32.mrf.mxu0
      %v1341 = vadd.f32 %v1272, %v1340
      %v1342 = vpop.f32.mrf.mxu0
      %1343 = vmatprep.mubr.f32.mxu0 0.0
      %1344 = vmatmul.mubr.f32.gmra.mxu0 %v352
      %v1345 = vpop.f32.mrf.mxu0
      %v1346 = vadd.f32 %v1272, %v1345
      %v1347 = vpop.f32.mrf.mxu0
      %1348 = vmatprep.mubr.f32.mxu0 0.0
      %1349 = vmatmul.mubr.f32.gmra.mxu0 %v355
      %v1350 = vpop.f32.mrf.mxu0
      %v1351 = vadd.f32 %v1272, %v1350
      %v1352 = vpop.f32.mrf.mxu0
      %1353 = vmatprep.mubr.f32.mxu0 0.0
      %1354 = vmatmul.mubr.f32.gmra.mxu0 %v358
      %v1355 = vpop.f32.mrf.mxu0
      %v1356 = vadd.f32 %v1272, %v1355
      %v1357 = vpop.f32.mrf.mxu0
      %1358 = vmatprep.mubr.f32.mxu0 0.0
      %1359 = vmatmul.mubr.f32.gmra.mxu0 %v361
      %v1360 = vpop.f32.mrf.mxu0
      %v1361 = vadd.f32 %v1272, %v1360
      %v1362 = vpop.f32.mrf.mxu0
      %1363 = vmatprep.mubr.f32.mxu0 0.0
      %1364 = vmatmul.mubr.f32.gmra.mxu0 %v364
      %v1365 = vpop.f32.mrf.mxu0
      %v1366 = vadd.f32 %v1272, %v1365
      %v1367 = vpop.f32.mrf.mxu0
      %1368 = vmatprep.mubr.f32.mxu0 0.0
      %1369 = vmatmul.mubr.f32.gmra.mxu0 %v367
      %v1370 = vpop.f32.mrf.mxu0
      %v1371 = vadd.f32 %v1272, %v1370
      %v1372 = vpop.f32.mrf.mxu0
      %1373 = vmatprep.mubr.f32.mxu0 0.0
      %1374 = vmatmul.mubr.f32.gmra.mxu0 %v370
      %v1375 = vpop.f32.mrf.mxu0
      %v1376 = vadd.f32 %v1272, %v1375
      %v1377 = vpop.f32.mrf.mxu0
      %1378 = vmatprep.mubr.f32.mxu0 0.0
      %1379 = vmatmul.mubr.f32.gmra.mxu0 %v373
      %v1380 = vpop.f32.mrf.mxu0
      %v1381 = vadd.f32 %v1272, %v1380
      %v1382 = vpop.f32.mrf.mxu0
      %1383 = vmatprep.mubr.f32.mxu0 0.0
      %1384 = vmatmul.mubr.f32.gmra.mxu0 %v376
      %v1385 = vpop.f32.mrf.mxu0
      %v1386 = vadd.f32 %v1272, %v1385
      %v1387 = vpop.f32.mrf.mxu0
      %1388 = vmatprep.mubr.f32.mxu0 0.0
      %1389 = vmatmul.mubr.f32.gmra.mxu0 %v379
      %v1390 = vpop.f32.mrf.mxu0
      %v1391 = vadd.f32 %v1272, %v1390
      %v1392 = vpop.f32.mrf.mxu0
      %1393 = vmatprep.mubr.f32.mxu0 0.0
      %1394 = vmatmul.mubr.f32.gmra.mxu0 %v382
      %v1395 = vpop.f32.mrf.mxu0
      %v1396 = vadd.f32 %v1272, %v1395
      %v1397 = vpop.f32.mrf.mxu0
      %1398 = vmatprep.mubr.f32.mxu0 0.0
      %1399 = vmatmul.mubr.f32.gmra.mxu0 %v385
      %v1400 = vpop.f32.mrf.mxu0
      %v1401 = vadd.f32 %v1272, %v1400
      %v1402 = vpop.f32.mrf.mxu0
      %1403 = vmatprep.mubr.f32.mxu0 0.0
      %1404 = vmatmul.mubr.f32.gmra.mxu0 %v388
      %v1405 = vpop.f32.mrf.mxu0
      %v1406 = vadd.f32 %v1272, %v1405
      %v1407 = vpop.f32.mrf.mxu0
      %1408 = vmatprep.mubr.f32.mxu0 0.0
      %1409 = vmatmul.mubr.f32.gmra.mxu0 %v391
      %v1410 = vpop.f32.mrf.mxu0
      %v1411 = vadd.f32 %v1272, %v1410
      %v1412 = vpop.f32.mrf.mxu0
      %1413 = vmatprep.mubr.f32.mxu0 0.0
      %1414 = vmatmul.mubr.f32.gmra.mxu0 %v394
      %v1415 = vpop.f32.mrf.mxu0
      %v1416 = vadd.f32 %v1272, %v1415
      %v1417 = vpop.f32.mrf.mxu0
      %1418 = vmatprep.mubr.f32.mxu0 0.0
      %1419 = vmatmul.mubr.f32.gmra.mxu0 %v397
      %v1420 = vpop.f32.mrf.mxu0
      %v1421 = vadd.f32 %v1272, %v1420
      %v1422 = vpop.f32.mrf.mxu0
      %1423 = vmatprep.mubr.f32.mxu0 0.0
      %1424 = vmatmul.mubr.f32.gmra.mxu0 %v400
      %v1425 = vpop.f32.mrf.mxu0
      %v1426 = vadd.f32 %v1272, %v1425
      %v1427 = vpop.f32.mrf.mxu0
      %1428 = vmatprep.mubr.f32.mxu0 0.0
      %1429 = vmatmul.mubr.f32.gmra.mxu0 %v403
      %v1430 = vpop.f32.mrf.mxu0
      %v1431 = vadd.f32 %v1272, %v1430
      %v1432 = vpop.f32.mrf.mxu0
      %1433 = vmatprep.mubr.f32.mxu0 0.0
      %1434 = vmatmul.mubr.f32.gmra.mxu0 %v406
      %v1435 = vpop.f32.mrf.mxu0
      %v1436 = vadd.f32 %v1272, %v1435
      %v1437 = vpop.f32.mrf.mxu0
      %1438 = vmatprep.mubr.f32.mxu0 0.0
      %1439 = vmatmul.mubr.f32.gmra.mxu0 %v409
      %v1440 = vpop.f32.mrf.mxu0
      %v1441 = vadd.f32 %v1272, %v1440
      %v1442 = vpop.f32.mrf.mxu0
      %1443 = vmatprep.mubr.f32.mxu0 0.0
      %1444 = vmatmul.mubr.f32.gmra.mxu0 %v412
      %v1445 = vpop.f32.mrf.mxu0
      %v1446 = vadd.f32 %v1272, %v1445
      %v1447 = vpop.f32.mrf.mxu0
      %1448 = vmatprep.mubr.f32.mxu0 0.0
      %1449 = vmatmul.mubr.f32.gmra.mxu0 %v415
      %v1450 = vpop.f32.mrf.mxu0
      %v1451 = vadd.f32 %v1272, %v1450
      %v1452 = vpop.f32.mrf.mxu0
      %1453 = vmatprep.mubr.f32.mxu0 0.0
      %1454 = vmatmul.mubr.f32.gmra.mxu0 %v418
      %v1455 = vpop.f32.mrf.mxu0
      %v1456 = vadd.f32 %v1272, %v1455
      %v1457 = vpop.f32.mrf.mxu0
      %1458 = vmatprep.mubr.f32.mxu0 0.0
      %1459 = vmatmul.mubr.f32.gmra.mxu0 %v421
      %v1460 = vpop.f32.mrf.mxu0
      %v1461 = vadd.f32 %v1272, %v1460
      %v1462 = vpop.f32.mrf.mxu0
      %1463 = vmatprep.mubr.f32.mxu0 0.0
      %1464 = vmatmul.mubr.f32.gmra.mxu0 %v424
      %v1465 = vpop.f32.mrf.mxu0
      %v1466 = vadd.f32 %v1272, %v1465
      %v1467 = vpop.f32.mrf.mxu0
      %1468 = vmatprep.mubr.f32.mxu0 0.0
      %1469 = vmatmul.mubr.f32.gmra.mxu0 %v427
      %v1470 = vpop.f32.mrf.mxu0
      %v1471 = vadd.f32 %v1272, %v1470
      %v1472 = vpop.f32.mrf.mxu0
      %1473 = vmatprep.mubr.f32.mxu0 0.0
      %1474 = vmatmul.mubr.f32.gmra.mxu0 %v430
      %v1475 = vpop.f32.mrf.mxu0
      %v1476 = vadd.f32 %v1272, %v1475
      %v1477 = vpop.f32.mrf.mxu0
      %1478 = vmatprep.mubr.f32.mxu0 0.0
      %1479 = vmatmul.mubr.f32.gmra.mxu0 %v433
      %v1480 = vpop.f32.mrf.mxu0
      %v1481 = vadd.f32 %v1272, %v1480
      %v1482 = vpop.f32.mrf.mxu0
      %1483 = vmatprep.mubr.f32.mxu0 0.0
      %1484 = vmatmul.mubr.f32.gmra.mxu0 %v436
      %v1485 = vpop.f32.mrf.mxu0
      %v1486 = vadd.f32 %v1272, %v1485
      %v1487 = vpop.f32.mrf.mxu0
      %1488 = vmatprep.mubr.f32.mxu0 0.0
      %1489 = vmatmul.mubr.f32.gmra.mxu0 %v439
      %v1490 = vpop.f32.mrf.mxu0
      %v1491 = vadd.f32 %v1272, %v1490
      %v1492 = vpop.f32.mrf.mxu0
      %1493 = vmatprep.mubr.f32.mxu0 0.0
      %1494 = vmatmul.mubr.f32.gmra.mxu0 %v442
      %v1495 = vpop.f32.mrf.mxu0
      %v1496 = vadd.f32 %v1272, %v1495
      %v1497 = vpop.f32.mrf.mxu0
      %1498 = vdwg.mxu0
      %1499 = vst.msk [vmem:[%s294] sm:$0xff] %vm769, %v1341
      %1500 = vst.msk [vmem:[%s294 + $0x8] sm:$0xff] %vm769, %v1346
      %1501 = vst.msk [vmem:[%s294 + $0x10] sm:$0xff] %vm769, %v1351
      %1502 = vst.msk [vmem:[%s294 + $0x18] sm:$0xff] %vm769, %v1356
      %1503 = vst.msk [vmem:[%s294 + $0x20] sm:$0xff] %vm769, %v1361
      %1504 = vst.msk [vmem:[%s294 + $0x28] sm:$0xff] %vm769, %v1366
      %1505 = vst.msk [vmem:[%s294 + $0x30] sm:$0xff] %vm769, %v1371
      %1506 = vst.msk [vmem:[%s294 + $0x38] sm:$0xff] %vm769, %v1376
      %1507 = vst.msk [vmem:[%s294 + $0x40] sm:$0xff] %vm769, %v1381
      %1508 = vst.msk [vmem:[%s294 + $0x48] sm:$0xff] %vm769, %v1386
      %1509 = vst.msk [vmem:[%s294 + $0x50] sm:$0xff] %vm769, %v1391
      %1510 = vst.msk [vmem:[%s294 + $0x58] sm:$0xff] %vm769, %v1396
      %1511 = vst.msk [vmem:[%s294 + $0x60] sm:$0xff] %vm769, %v1401
      %1512 = vst.msk [vmem:[%s294 + $0x68] sm:$0xff] %vm769, %v1406
      %1513 = vst.msk [vmem:[%s294 + $0x70] sm:$0xff] %vm769, %v1411
      %1514 = vst.msk [vmem:[%s294 + $0x78] sm:$0xff] %vm769, %v1416
      %1515 = vst.msk [vmem:[%s294 + $0x80] sm:$0xff] %vm769, %v1421
      %1516 = vst.msk [vmem:[%s294 + $0x88] sm:$0xff] %vm769, %v1426
      %1517 = vst.msk [vmem:[%s294 + $0x90] sm:$0xff] %vm769, %v1431
      %1518 = vst.msk [vmem:[%s294 + $0x98] sm:$0xff] %vm769, %v1436
      %1519 = vst.msk [vmem:[%s294 + $0xa0] sm:$0xff] %vm769, %v1441
      %1520 = vst.msk [vmem:[%s294 + $0xa8] sm:$0xff] %vm769, %v1446
      %1521 = vst.msk [vmem:[%s294 + $0xb0] sm:$0xff] %vm769, %v1451
      %1522 = vst.msk [vmem:[%s294 + $0xb8] sm:$0xff] %vm769, %v1456
      %1523 = vst.msk [vmem:[%s294 + $0xc0] sm:$0xff] %vm769, %v1461
      %1524 = vst.msk [vmem:[%s294 + $0xc8] sm:$0xff] %vm769, %v1466
      %1525 = vst.msk [vmem:[%s294 + $0xd0] sm:$0xff] %vm769, %v1471
      %1526 = vst.msk [vmem:[%s294 + $0xd8] sm:$0xff] %vm769, %v1476
      %1527 = vst.msk [vmem:[%s294 + $0xe0] sm:$0xff] %vm769, %v1481
      %1528 = vst.msk [vmem:[%s294 + $0xe8] sm:$0xff] %vm769, %v1486
      %1529 = vst.msk [vmem:[%s294 + $0xf0] sm:$0xff] %vm769, %v1491
      %1530 = vst.msk [vmem:[%s294 + $0xf8] sm:$0xff] %vm769, %v1496
      %s1531 = smul.u32 32, %s19
      %p1532 = scmp.lt.s32.totalorder %s1531, 63
      %s1533 = scalar_select %p1532, %s1531, 63
      %s1534 = smul.addr %s1533, 8
      %s1535 = scalar_lea.vmem %s6, %s1534
      %s1536 = smul.u32 32, %s19
      %p1537 = scmp.lt.s32.totalorder %s1536, 63
      %s1538 = scalar_select %p1537, %s1536, 63
      %s1539 = smul.addr %s1538, 8
      %s1540 = scalar_lea.vmem %s7, %s1539
      // Predicated region
      $region45: #{tpu_custom_call.1} parent=43 // pred_check
        %p1541 = pneg %p168
      $region46: #{tpu_custom_call.1} parent=43 // pred_check_branch
        %1543 = sbr.rel (%p1541) target = $region48
      $region47: #{tpu_custom_call.1} parent=43 // pred_region
        %s1544 = smul.u32 32, %s19
      $region48: #{tpu_custom_call.1} parent=43 // pred_fallthru
        _
      // Predicated region
      $region49: #{tpu_custom_call.1} parent=43 // pred_check
        %p1545 = pneg %p194
      $region50: #{tpu_custom_call.1} parent=43 // pred_check_branch
        %1547 = sbr.rel (%p1545) target = $region52
      $region51: #{tpu_custom_call.1} parent=43 // pred_region
        %s1548 = smul.u32 32, %s19
      $region52: #{tpu_custom_call.1} parent=43 // pred_fallthru
        _
    $region44: #{tpu_custom_call.1} parent=5 // pred_fallthru
      _
    %p1549 = scmp.le.s32.totalorder 2, %s14
    // Predicated region
    $region53: #{tpu_custom_call.1} parent=5 // pred_check
      %p1550 = pneg %p1549
    $region54: #{tpu_custom_call.1} parent=5 // pred_check_branch
      %1552 = sbr.rel (%p1550) target = $region56
    $region55: #{tpu_custom_call.1} parent=5 // pred_region
      %s1553 = ssub.s32 %s14, 2
      // Predicated region
      $region57: #{tpu_custom_call.1} parent=55 // pred_check
        %p1554 = pneg %p174
      $region58: #{tpu_custom_call.1} parent=55 // pred_check_branch
        %1556 = sbr.rel (%p1554) target = $region60
      $region59: #{tpu_custom_call.1} parent=55 // pred_region
        %s1557 = smul.u32 32, %s20
        %p1558 = scmp.lt.s32.totalorder %s1557, 63
        %s1559 = scalar_select %p1558, %s1557, 63
        %s1560 = smul.addr %s1559, 8
        %s1561 = scalar_lea.vmem %s6, %s1560
      $region60: #{tpu_custom_call.1} parent=55 // pred_fallthru
        _
      // Predicated region
      $region61: #{tpu_custom_call.1} parent=55 // pred_check
        %p1562 = pneg %p200
      $region62: #{tpu_custom_call.1} parent=55 // pred_check_branch
        %1564 = sbr.rel (%p1562) target = $region64
      $region63: #{tpu_custom_call.1} parent=55 // pred_region
        %s1565 = smul.u32 32, %s20
        %p1566 = scmp.lt.s32.totalorder %s1565, 63
        %s1567 = scalar_select %p1566, %s1565, 63
        %s1568 = smul.addr %s1567, 8
        %s1569 = scalar_lea.vmem %s7, %s1568
      $region64: #{tpu_custom_call.1} parent=55 // pred_fallthru
        _
    $region56: #{tpu_custom_call.1} parent=5 // pred_fallthru
      _
  $region6: #{tpu_custom_call.1} parent=0 // loop_footer
    %s18 = sadd.s32 1, %s14
  $region7: #{tpu_custom_call.1} parent=0 // loop_footer_branch
    %13 = sbr.rel target = $region3
  $region8: #{tpu_custom_call.1} parent=0 // loop_exit
    _

</llo_original>
